<compile_context>
chip_gen: v6e
topology: v6e:2x2x1
jax: 0.10.0
libtpu: 0.0.40
codegen_flags: <defaults>
</compile_context>

<pallas_src>
import functools
import math

import jax
import jax.numpy as jnp
from jax.experimental import pallas as pl
from jax.experimental.pallas import tpu as pltpu

_INV_SQRT2 = 1.0 / math.sqrt(2.0)


def _round_up(x, m):
    return (x + m - 1) // m * m


def _sublane(dtype):
    # Sublane tile: 8 rows of 32-bit; sub-32-bit dtypes pack along sublanes.
    return max(8, 8 * (4 // jnp.dtype(dtype).itemsize))


def _bert_lm_head_kernel(x_ref, fut_ref, wt_ref, bt_ref, g_ref, be_ref,
                         wd_ref, bd_ref, o_ref, h_scratch, *, eps, hidden):
    # Grid = (token_tiles, vocab_tiles); vocab is the inner ("arbitrary") axis.
    # At j == 0 the transform (dense + GELU + LayerNorm) runs once per token
    # tile and is written, together with the futures tile, into h_scratch of
    # shape (tm, H + Fp).  Every vocab tile then does one merged matmul against
    # the pre-concatenated decoder weight (H + Fp, tn).
    @pl.when(pl.program_id(1) == 0)
    def _transform():
        # Dense: operands in compute dtype (bf16 fast path), f32 accumulation.
        y = jnp.dot(x_ref[...], wt_ref[...], preferred_element_type=jnp.float32)
        y = y + bt_ref[...]
        # GELU (exact erf form == torch.nn.GELU default), f32 epilogue.
        y = 0.5 * y * (1.0 + jax.lax.erf(y * _INV_SQRT2))
        # LayerNorm: single-pass statistics (sum & sum-of-squares) in f32.
        inv_h = 1.0 / hidden
        mean = jnp.sum(y, axis=-1, keepdims=True) * inv_h
        ex2 = jnp.sum(y * y, axis=-1, keepdims=True) * inv_h
        var = jnp.maximum(ex2 - mean * mean, 0.0)
        inv_std = jax.lax.rsqrt(var + eps)
        normed = (y - mean) * inv_std * g_ref[...] + be_ref[...]
        # "concat" = write LN output and futures side by side into the scratch.
        h_scratch[:, :hidden] = normed.astype(h_scratch.dtype)
        h_scratch[:, hidden:] = fut_ref[...].astype(h_scratch.dtype)

    # Single merged decoder matmul: cat(h, futures) @ W_dec + b_dec.
    acc = jnp.dot(h_scratch[...], wd_ref[...], preferred_element_type=jnp.float32)
    o_ref[...] = (acc + bd_ref[...]).astype(o_ref.dtype)


def prepare_bert_lm_head_weights(w_t, b_t, gamma, beta, w_dec, b_dec, *,
                                 hidden_size, compute_dtype=jnp.bfloat16,
                                 tn=1024):
    """One-time weight preprocessing.  Cache the result across forward calls so
    the decoder weight is not re-cast / re-padded in HBM every step.

    Builds a single pre-concatenated decoder weight of shape [H + Fp, V_pad]
    (futures rows padded to the sublane tile, vocab padded to a multiple of the
    chosen vocab tile `tn`) plus f32 bias / LayerNorm rows.
    """
    H = hidden_size
    KF, V = w_dec.shape
    F = KF - H
    assert F >= 1, "decoder weight must be [hidden + n_futures, vocab]"
    cdt = jnp.dtype(compute_dtype)
    f32 = jnp.float32

    # Futures rows padded only to the sublane tile (16 bf16 / 8 f32); padding
    # is exact since the padded weight rows and padded input lanes are zero.
    Fp = _round_up(max(F, 1), _sublane(cdt))

    tn = max(128, (int(tn) // 128) * 128)
    tn = min(tn, _round_up(V, 128))
    Vp = _round_up(V, tn)

    w_dec_cat = jnp.zeros((H + Fp, Vp), dtype=cdt)
    w_dec_cat = w_dec_cat.at[:H, :V].set(w_dec[:H].astype(cdt))
    w_dec_cat = w_dec_cat.at[H:H + F, :V].set(w_dec[H:].astype(cdt))
    b_dec_pad = jnp.zeros((1, Vp), dtype=f32).at[0, :V].set(b_dec.astype(f32))

    return {
        "w_t": w_t.astype(cdt),
        "b_t": b_t.reshape(1, H).astype(f32),
        "gamma": gamma.reshape(1, H).astype(f32),
        "beta": beta.reshape(1, H).astype(f32),
        "w_dec": w_dec_cat,
        "b_dec": b_dec_pad,
        "hidden": H,
        "n_futures": F,
        "fp": Fp,
        "vocab": V,
        "vocab_pad": Vp,
        "tn": tn,
        "compute_dtype": cdt,
    }


def bert_lm_head_apply(hidden_states, added_futures, prepared, *,
                       layer_norm_eps, tm=512, out_dtype=None,
                       vmem_limit_bytes=48 * 1024 * 1024):
    """Fused BertLMPredictionHead forward using cached prepared weights.

    hidden_states: [B, S, H]; added_futures: [B, S, F].  Returns [B, S, V].
    Matmul operands run in prepared["compute_dtype"] with f32 accumulation;
    GELU / LayerNorm epilogue is f32.  out_dtype defaults to the input dtype
    (pass jnp.bfloat16 to halve the T x V writeback).
    """
    B, S, H = hidden_states.shape
    Bf, Sf, F = added_futures.shape
    assert (B, S) == (Bf, Sf), "hidden_states / added_futures batch mismatch"
    assert H == prepared["hidden"] and F == prepared["n_futures"]

    cdt = prepared["compute_dtype"]
    out_dtype = out_dtype or hidden_states.dtype
    Fp = prepared["fp"]
    V = prepared["vocab"]
    Vp = prepared["vocab_pad"]
    tn = prepared["tn"]
    T = B * S

    # Token tile: multiple of 8 sublanes, clamped to the (padded) token count.
    # Note (v7x): keep T // tm >= 2 so the "parallel" token axis can shard
    # across both TensorCores; on single-TC v5e/v6e larger tm is strictly better
    # (decoder weight streamed once per token tile).
    tm = max(8, (int(tm) // 8) * 8)
    tm = min(tm, _round_up(T, 8))
    Tp = _round_up(T, tm)

    x2 = hidden_states.reshape(T, H).astype(cdt)
    f2 = added_futures.reshape(T, F).astype(cdt)
    if Tp != T:
        x2 = jnp.pad(x2, ((0, Tp - T), (0, 0)))
        f2 = jnp.pad(f2, ((0, Tp - T), (0, 0)))
    if Fp != F:
        f2 = jnp.pad(f2, ((0, 0), (0, Fp - F)))

    grid = (Tp // tm, Vp // tn)
    kernel = functools.partial(_bert_lm_head_kernel,
                               eps=float(layer_norm_eps), hidden=H)

    def run(single_buffer_consts):
        # Grid-invariant operands (index map always (0, 0)) don't need a second
        # pipeline buffer; single-buffering them frees VMEM for bigger tiles.
        const_kw = ({"pipeline_mode": pl.Buffered(1)}
                    if single_buffer_consts else {})
        in_specs = [
            pl.BlockSpec((tm, H), lambda i, j: (i, 0)),              # x tile
            pl.BlockSpec((tm, Fp), lambda i, j: (i, 0)),             # futures tile
            pl.BlockSpec((H, H), lambda i, j: (0, 0), **const_kw),   # transform W
            pl.BlockSpec((1, H), lambda i, j: (0, 0), **const_kw),   # transform b
            pl.BlockSpec((1, H), lambda i, j: (0, 0), **const_kw),   # LN gamma
            pl.BlockSpec((1, H), lambda i, j: (0, 0), **const_kw),   # LN beta
            pl.BlockSpec((H + Fp, tn), lambda i, j: (0, j)),         # merged dec W
            pl.BlockSpec((1, tn), lambda i, j: (0, j)),              # dec bias
        ]
        return pl.pallas_call(
            kernel,
            out_shape=jax.ShapeDtypeStruct((Tp, Vp), out_dtype),
            grid_spec=pltpu.PrefetchScalarGridSpec(
                num_scalar_prefetch=0,
                grid=grid,
                in_specs=in_specs,
                out_specs=pl.BlockSpec((tm, tn), lambda i, j: (i, j)),
                scratch_shapes=[pltpu.VMEM((tm, H + Fp), cdt)],
            ),
            compiler_params=pltpu.CompilerParams(
                dimension_semantics=("parallel", "arbitrary"),
                vmem_limit_bytes=vmem_limit_bytes),
        )(x2, f2, prepared["w_t"], prepared["b_t"], prepared["gamma"],
          prepared["beta"], prepared["w_dec"], prepared["b_dec"])

    try:
        out = jax.block_until_ready(run(True))
    except Exception:
        # Fallback for installs without single-buffer pipeline_mode support.
        out = jax.block_until_ready(run(False))

    return out[:T, :V].reshape(B, S, V)


def bert_lm_prediction_head(hidden_states, added_futures, w_t, b_t, gamma, beta,
                            w_dec, b_dec, *, layer_norm_eps,
                            compute_dtype=jnp.bfloat16, tm=512, tn=1024,
                            out_dtype=None):
    """Convenience one-shot wrapper.  In production, call
    prepare_bert_lm_head_weights once and reuse it with bert_lm_head_apply."""
    prepared = prepare_bert_lm_head_weights(
        w_t, b_t, gamma, beta, w_dec, b_dec,
        hidden_size=hidden_states.shape[-1],
        compute_dtype=compute_dtype, tn=tn)
    return bert_lm_head_apply(hidden_states, added_futures, prepared,
                              layer_norm_eps=layer_norm_eps, tm=tm,
                              out_dtype=out_dtype)


# TODO(synk): optional fp8 (v7x) / int8 (v5e,v6e) quantization of the decoder
# weight stream is not implemented; it would halve the dominant HBM stream.


def reference(hidden_states, added_futures, w_t, b_t, gamma, beta, w_dec, b_dec,
              *, layer_norm_eps, compute_dtype=jnp.float32, out_dtype=None):
    """Pure-JAX reference mirroring the kernel's dtype handling."""
    f32 = jnp.float32
    out_dtype = out_dtype or compute_dtype
    prec = jax.lax.Precision.HIGHEST
    H = hidden_states.shape[-1]

    x = hidden_states.astype(compute_dtype)
    y = jnp.dot(x, w_t.astype(compute_dtype),
                preferred_element_type=f32, precision=prec)
    y = y + b_t.astype(f32)
    y = 0.5 * y * (1.0 + jax.lax.erf(y * _INV_SQRT2))
    mean = jnp.mean(y, axis=-1, keepdims=True)
    var = jnp.mean(jnp.square(y - mean), axis=-1, keepdims=True)
    h = (y - mean) * jax.lax.rsqrt(var + layer_norm_eps)
    h = h * gamma.astype(f32) + beta.astype(f32)
    h = h.astype(compute_dtype)

    f = added_futures.astype(compute_dtype)
    out = (jnp.dot(h, w_dec[:H].astype(compute_dtype),
                   preferred_element_type=f32, precision=prec)
           + jnp.dot(f, w_dec[H:].astype(compute_dtype),
                     preferred_element_type=f32, precision=prec)
           + b_dec.astype(f32))
    return out.astype(out_dtype)


if __name__ == "__main__":
    layer_norm_eps = 1e-12

    # ---------- Config 1: aligned small shapes ----------
    batch, seq, hidden, n_futures, vocab = 2, 8, 128, 8, 512
    key = jax.random.PRNGKey(0)
    ks = jax.random.split(key, 16)
    x = jax.random.normal(ks[0], (batch, seq, hidden), dtype=jnp.float32)
    fut = jax.random.normal(ks[1], (batch, seq, n_futures), dtype=jnp.float32)
    w_t = 0.02 * jax.random.normal(ks[2], (hidden, hidden), dtype=jnp.float32)
    b_t = 0.02 * jax.random.normal(ks[3], (hidden,), dtype=jnp.float32)
    gamma = 1.0 + 0.1 * jax.random.normal(ks[4], (hidden,), dtype=jnp.float32)
    beta = 0.1 * jax.random.normal(ks[5], (hidden,), dtype=jnp.float32)
    w_dec = 0.02 * jax.random.normal(ks[6], (hidden + n_futures, vocab),
                                     dtype=jnp.float32)
    b_dec = 0.02 * jax.random.normal(ks[7], (vocab,), dtype=jnp.float32)

    # f32-operand path: tight correctness check (prepare once, reuse).
    prep_f32 = prepare_bert_lm_head_weights(
        w_t, b_t, gamma, beta, w_dec, b_dec,
        hidden_size=hidden, compute_dtype=jnp.float32, tn=1024)
    out32 = bert_lm_head_apply(x, fut, prep_f32, layer_norm_eps=layer_norm_eps)
    out32 = jax.block_until_ready(out32)
    ref32 = reference(x, fut, w_t, b_t, gamma, beta, w_dec, b_dec,
                      layer_norm_eps=layer_norm_eps, compute_dtype=jnp.float32)
    assert out32.shape == (batch, seq, vocab)
    assert jnp.allclose(out32, ref32, atol=2e-3, rtol=2e-3), "f32 mismatch"

    # Default bf16-operand fast path (f32 accumulate, f32 output).
    prep_bf16 = prepare_bert_lm_head_weights(
        w_t, b_t, gamma, beta, w_dec, b_dec,
        hidden_size=hidden, compute_dtype=jnp.bfloat16, tn=1024)
    out_bf = bert_lm_head_apply(x, fut, prep_bf16, layer_norm_eps=layer_norm_eps)
    out_bf = jax.block_until_ready(out_bf)
    ref_bf = reference(x, fut, w_t, b_t, gamma, beta, w_dec, b_dec,
                       layer_norm_eps=layer_norm_eps,
                       compute_dtype=jnp.bfloat16, out_dtype=jnp.float32)
    assert out_bf.shape == (batch, seq, vocab)
    assert jnp.allclose(out_bf, ref_bf, atol=3e-2, rtol=3e-2), "bf16 mismatch"

    # ---------- Config 2: ragged shapes (T, V, F padding; multi-tile grid) ----
    b2, s2, h2, f2n, v2 = 3, 16, 128, 5, 1000
    x2 = jax.random.normal(ks[8], (b2, s2, h2), dtype=jnp.float32)
    fut2 = jax.random.normal(ks[9], (b2, s2, f2n), dtype=jnp.float32)
    w_t2 = 0.02 * jax.random.normal(ks[10], (h2, h2), dtype=jnp.float32)
    b_t2 = 0.02 * jax.random.normal(ks[11], (h2,), dtype=jnp.float32)
    g2 = 1.0 + 0.1 * jax.random.normal(ks[12], (h2,), dtype=jnp.float32)
    be2 = 0.1 * jax.random.normal(ks[13], (h2,), dtype=jnp.float32)
    w_dec2 = 0.02 * jax.random.normal(ks[14], (h2 + f2n, v2), dtype=jnp.float32)
    b_dec2 = 0.02 * jax.random.normal(ks[15], (v2,), dtype=jnp.float32)

    out2 = bert_lm_prediction_head(x2, fut2, w_t2, b_t2, g2, be2, w_dec2, b_dec2,
                                   layer_norm_eps=layer_norm_eps, tm=32, tn=256)
    out2 = jax.block_until_ready(out2)
    ref2 = reference(x2, fut2, w_t2, b_t2, g2, be2, w_dec2, b_dec2,
                     layer_norm_eps=layer_norm_eps,
                     compute_dtype=jnp.bfloat16, out_dtype=jnp.float32)
    assert out2.shape == (b2, s2, v2)
    assert jnp.allclose(out2, ref2, atol=3e-2, rtol=3e-2), "ragged bf16 mismatch"

    print("KERNEL_OK")
</pallas_src>

<mosaic_0001>
module attributes {stable_mosaic.version = 11 : i64} {
  func.func @_bert_lm_head_kernel(%arg0: i32, %arg1: i32, %arg2: memref<16x128xf32, #tpu.memory_space<vmem>>, %arg3: memref<16x8xf32, #tpu.memory_space<vmem>>, %arg4: memref<128x128xf32, #tpu.memory_space<vmem>>, %arg5: memref<1x128xf32, #tpu.memory_space<vmem>>, %arg6: memref<1x128xf32, #tpu.memory_space<vmem>>, %arg7: memref<1x128xf32, #tpu.memory_space<vmem>>, %arg8: memref<136x512xf32, #tpu.memory_space<vmem>>, %arg9: memref<1x512xf32, #tpu.memory_space<vmem>>, %arg10: memref<16x512xf32, #tpu.memory_space<vmem>>, %arg11: memref<16x136xf32, #tpu.memory_space<vmem>>) attributes {dimension_semantics = [#tpu.dimension_semantics<parallel>, #tpu.dimension_semantics<arbitrary>], iteration_bounds = array<i64: 1, 1>, scalar_prefetch = 0 : i64, scratch_operands = 1 : i64, tpu.core_type = #tpu.core_type<tc>, window_params = [{transform_indices = @transform_0, window_bounds = array<i64: 16, 128>}, {transform_indices = @transform_1, window_bounds = array<i64: 16, 8>}, {pipeline_mode = #tpu.pipeline_mode<synchronous>, transform_indices = @transform_2, window_bounds = array<i64: 128, 128>}, {pipeline_mode = #tpu.pipeline_mode<synchronous>, transform_indices = @transform_3, window_bounds = array<i64: 1, 128>}, {pipeline_mode = #tpu.pipeline_mode<synchronous>, transform_indices = @transform_4, window_bounds = array<i64: 1, 128>}, {pipeline_mode = #tpu.pipeline_mode<synchronous>, transform_indices = @transform_5, window_bounds = array<i64: 1, 128>}, {transform_indices = @transform_6, window_bounds = array<i64: 136, 512>}, {transform_indices = @transform_7, window_bounds = array<i64: 1, 512>}, {transform_indices = @transform_8, window_bounds = array<i64: 16, 512>}]} {
    %c0_i32 = arith.constant 0 : i32
    %0 = arith.cmpi eq, %arg1, %c0_i32 : i32
    %1 = arith.extui %0 : i1 to i32
    %c0_i32_0 = arith.constant 0 : i32
    %2 = arith.cmpi ne, %1, %c0_i32_0 : i32
    scf.if %2 {
      %c0_8 = arith.constant 0 : index
      %c0_9 = arith.constant 0 : index
      %10 = vector.load %arg2[%c0_8, %c0_9] : memref<16x128xf32, #tpu.memory_space<vmem>>, vector<16x128xf32>
      %c0_10 = arith.constant 0 : index
      %c0_11 = arith.constant 0 : index
      %11 = vector.load %arg4[%c0_10, %c0_11] : memref<128x128xf32, #tpu.memory_space<vmem>>, vector<128x128xf32>
      %cst_12 = arith.constant dense<0.000000e+00> : vector<16x128xf32>
      %12 = tpu.matmul %10, %11, %cst_12 {dimension_numbers = #tpu.dot_dimension_numbers<[1], [0], [0], [1], [0, 0, 1, 1], [], []>} : vector<16x128xf32>, vector<128x128xf32>, vector<16x128xf32> -> vector<16x128xf32>
      %c0_13 = arith.constant 0 : index
      %c0_14 = arith.constant 0 : index
      %13 = vector.load %arg5[%c0_13, %c0_14] : memref<1x128xf32, #tpu.memory_space<vmem>>, vector<1x128xf32>
      %14 = vector.broadcast %13 : vector<1x128xf32> to vector<16x128xf32>
      %15 = arith.addf %12, %14 : vector<16x128xf32>
      %cst_15 = arith.constant 5.000000e-01 : f32
      %16 = vector.broadcast %cst_15 : f32 to vector<16x128xf32>
      %17 = arith.mulf %16, %15 : vector<16x128xf32>
      %cst_16 = arith.constant 0.707106769 : f32
      %18 = vector.broadcast %cst_16 : f32 to vector<16x128xf32>
      %19 = arith.mulf %15, %18 : vector<16x128xf32>
      %20 = math.erf %19 : vector<16x128xf32>
      %cst_17 = arith.constant 1.000000e+00 : f32
      %21 = vector.broadcast %cst_17 : f32 to vector<16x128xf32>
      %22 = arith.addf %21, %20 : vector<16x128xf32>
      %23 = arith.mulf %17, %22 : vector<16x128xf32>
      %cst_18 = arith.constant dense<0.000000e+00> : vector<16xf32>
      %24 = vector.multi_reduction <add>, %23, %cst_18 [1] : vector<16x128xf32> to vector<16xf32>
      %25 = vector.shape_cast %24 : vector<16xf32> to vector<16x1xf32>
      %cst_19 = arith.constant 7.812500e-03 : f32
      %26 = vector.broadcast %cst_19 : f32 to vector<16x1xf32>
      %27 = arith.mulf %25, %26 : vector<16x1xf32>
      %28 = arith.mulf %23, %23 : vector<16x128xf32>
      %cst_20 = arith.constant dense<0.000000e+00> : vector<16xf32>
      %29 = vector.multi_reduction <add>, %28, %cst_20 [1] : vector<16x128xf32> to vector<16xf32>
      %30 = vector.shape_cast %29 : vector<16xf32> to vector<16x1xf32>
      %cst_21 = arith.constant 7.812500e-03 : f32
      %31 = vector.broadcast %cst_21 : f32 to vector<16x1xf32>
      %32 = arith.mulf %30, %31 : vector<16x1xf32>
      %33 = arith.mulf %27, %27 : vector<16x1xf32>
      %34 = arith.subf %32, %33 : vector<16x1xf32>
      %cst_22 = arith.constant 0.000000e+00 : f32
      %35 = vector.broadcast %cst_22 : f32 to vector<16x1xf32>
      %36 = arith.maximumf %34, %35 : vector<16x1xf32>
      %cst_23 = arith.constant 9.99999996E-13 : f32
      %37 = vector.broadcast %cst_23 : f32 to vector<16x1xf32>
      %38 = arith.addf %36, %37 : vector<16x1xf32>
      %39 = math.rsqrt %38 : vector<16x1xf32>
      %40 = vector.broadcast %27 : vector<16x1xf32> to vector<16x128xf32>
      %41 = arith.subf %23, %40 : vector<16x128xf32>
      %42 = vector.broadcast %39 : vector<16x1xf32> to vector<16x128xf32>
      %43 = arith.mulf %41, %42 : vector<16x128xf32>
      %c0_24 = arith.constant 0 : index
      %c0_25 = arith.constant 0 : index
      %44 = vector.load %arg6[%c0_24, %c0_25] : memref<1x128xf32, #tpu.memory_space<vmem>>, vector<1x128xf32>
      %45 = vector.broadcast %44 : vector<1x128xf32> to vector<16x128xf32>
      %46 = arith.mulf %43, %45 : vector<16x128xf32>
      %c0_26 = arith.constant 0 : index
      %c0_27 = arith.constant 0 : index
      %47 = vector.load %arg7[%c0_26, %c0_27] : memref<1x128xf32, #tpu.memory_space<vmem>>, vector<1x128xf32>
      %48 = vector.broadcast %47 : vector<1x128xf32> to vector<16x128xf32>
      %49 = arith.addf %46, %48 : vector<16x128xf32>
      %c0_28 = arith.constant 0 : index
      %c0_29 = arith.constant 0 : index
      %50 = vector.load %arg11[%c0_28, %c0_29] : memref<16x136xf32, #tpu.memory_space<vmem>>, vector<16x128xf32>
      tpu.vector_store %arg11[%c0_28, %c0_29], %49 {strides = array<i32>} : memref<16x136xf32, #tpu.memory_space<vmem>>, vector<16x128xf32>,
      %c0_30 = arith.constant 0 : index
      %c0_31 = arith.constant 0 : index
      %51 = vector.load %arg3[%c0_30, %c0_31] : memref<16x8xf32, #tpu.memory_space<vmem>>, vector<16x8xf32>
      %c0_32 = arith.constant 0 : index
      %c128 = arith.constant 128 : index
      %52 = vector.load %arg11[%c0_32, %c128] : memref<16x136xf32, #tpu.memory_space<vmem>>, vector<16x8xf32>
      tpu.vector_store %arg11[%c0_32, %c128], %51 {strides = array<i32>} : memref<16x136xf32, #tpu.memory_space<vmem>>, vector<16x8xf32>,
    } else {
    }
    %c0 = arith.constant 0 : index
    %c0_1 = arith.constant 0 : index
    %3 = vector.load %arg11[%c0, %c0_1] : memref<16x136xf32, #tpu.memory_space<vmem>>, vector<16x136xf32>
    %c0_2 = arith.constant 0 : index
    %c0_3 = arith.constant 0 : index
    %4 = vector.load %arg8[%c0_2, %c0_3] : memref<136x512xf32, #tpu.memory_space<vmem>>, vector<136x512xf32>
    %cst = arith.constant dense<0.000000e+00> : vector<16x512xf32>
    %5 = tpu.matmul %3, %4, %cst {dimension_numbers = #tpu.dot_dimension_numbers<[1], [0], [0], [1], [0, 0, 1, 1], [], []>} : vector<16x136xf32>, vector<136x512xf32>, vector<16x512xf32> -> vector<16x512xf32>
    %c0_4 = arith.constant 0 : index
    %c0_5 = arith.constant 0 : index
    %6 = vector.load %arg9[%c0_4, %c0_5] : memref<1x512xf32, #tpu.memory_space<vmem>>, vector<1x512xf32>
    %7 = vector.broadcast %6 : vector<1x512xf32> to vector<16x512xf32>
    %8 = arith.addf %5, %7 : vector<16x512xf32>
    %c0_6 = arith.constant 0 : index
    %c0_7 = arith.constant 0 : index
    %9 = vector.load %arg10[%c0_6, %c0_7] : memref<16x512xf32, #tpu.memory_space<vmem>>, vector<16x512xf32>
    tpu.vector_store %arg10[%c0_6, %c0_7], %8 {strides = array<i32>} : memref<16x512xf32, #tpu.memory_space<vmem>>, vector<16x512xf32>,
    return
  }
  func.func @transform_0(%arg0: i32, %arg1: i32) -> (i32, i32) {
    %c0_i32 = arith.constant 0 : i32
    %c0_i32_0 = arith.constant 0 : i32
    return %arg0, %c0_i32 : i32, i32
  }
  func.func @transform_1(%arg0: i32, %arg1: i32) -> (i32, i32) {
    %c0_i32 = arith.constant 0 : i32
    %c0_i32_0 = arith.constant 0 : i32
    return %arg0, %c0_i32 : i32, i32
  }
  func.func @transform_2(%arg0: i32, %arg1: i32) -> (i32, i32) {
    %c0_i32 = arith.constant 0 : i32
    %c0_i32_0 = arith.constant 0 : i32
    %c0_i32_1 = arith.constant 0 : i32
    return %c0_i32, %c0_i32_0 : i32, i32
  }
  func.func @transform_3(%arg0: i32, %arg1: i32) -> (i32, i32) {
    %c0_i32 = arith.constant 0 : i32
    %c0_i32_0 = arith.constant 0 : i32
    %c0_i32_1 = arith.constant 0 : i32
    return %c0_i32, %c0_i32_0 : i32, i32
  }
  func.func @transform_4(%arg0: i32, %arg1: i32) -> (i32, i32) {
    %c0_i32 = arith.constant 0 : i32
    %c0_i32_0 = arith.constant 0 : i32
    %c0_i32_1 = arith.constant 0 : i32
    return %c0_i32, %c0_i32_0 : i32, i32
  }
  func.func @transform_5(%arg0: i32, %arg1: i32) -> (i32, i32) {
    %c0_i32 = arith.constant 0 : i32
    %c0_i32_0 = arith.constant 0 : i32
    %c0_i32_1 = arith.constant 0 : i32
    return %c0_i32, %c0_i32_0 : i32, i32
  }
  func.func @transform_6(%arg0: i32, %arg1: i32) -> (i32, i32) {
    %c0_i32 = arith.constant 0 : i32
    %c0_i32_0 = arith.constant 0 : i32
    return %c0_i32, %arg1 : i32, i32
  }
  func.func @transform_7(%arg0: i32, %arg1: i32) -> (i32, i32) {
    %c0_i32 = arith.constant 0 : i32
    %c0_i32_0 = arith.constant 0 : i32
    return %c0_i32, %arg1 : i32, i32
  }
  func.func @transform_8(%arg0: i32, %arg1: i32) -> (i32, i32) {
    %c0_i32 = arith.constant 0 : i32
    return %arg0, %arg1 : i32, i32
  }
}

module attributes {stable_mosaic.version = 11 : i64} {
  func.func @_bert_lm_head_kernel(%arg0: i32, %arg1: i32, %arg2: memref<16x128xf32, #tpu.memory_space<vmem>>, %arg3: memref<16x8xf32, #tpu.memory_space<vmem>>, %arg4: memref<128x128xf32, #tpu.memory_space<vmem>>, %arg5: memref<1x128xf32, #tpu.memory_space<vmem>>, %arg6: memref<1x128xf32, #tpu.memory_space<vmem>>, %arg7: memref<1x128xf32, #tpu.memory_space<vmem>>, %arg8: memref<136x512xf32, #tpu.memory_space<vmem>>, %arg9: memref<1x512xf32, #tpu.memory_space<vmem>>, %arg10: memref<16x512xf32, #tpu.memory_space<vmem>>, %arg11: memref<16x136xf32, #tpu.memory_space<vmem>>) attributes {dimension_semantics = [#tpu.dimension_semantics<parallel>, #tpu.dimension_semantics<arbitrary>], iteration_bounds = array<i64: 1, 1>, scalar_prefetch = 0 : i64, scratch_operands = 1 : i64, tpu.core_type = #tpu.core_type<tc>, window_params = [{transform_indices = @transform_0, window_bounds = array<i64: 16, 128>}, {transform_indices = @transform_1, window_bounds = array<i64: 16, 8>}, {pipeline_mode = #tpu.pipeline_mode<synchronous>, transform_indices = @transform_2, window_bounds = array<i64: 128, 128>}, {pipeline_mode = #tpu.pipeline_mode<synchronous>, transform_indices = @transform_3, window_bounds = array<i64: 1, 128>}, {pipeline_mode = #tpu.pipeline_mode<synchronous>, transform_indices = @transform_4, window_bounds = array<i64: 1, 128>}, {pipeline_mode = #tpu.pipeline_mode<synchronous>, transform_indices = @transform_5, window_bounds = array<i64: 1, 128>}, {transform_indices = @transform_6, window_bounds = array<i64: 136, 512>}, {transform_indices = @transform_7, window_bounds = array<i64: 1, 512>}, {transform_indices = @transform_8, window_bounds = array<i64: 16, 512>}]} {
    %c0_i32 = arith.constant 0 : i32
    %0 = arith.cmpi eq, %arg1, %c0_i32 : i32
    %1 = arith.extui %0 : i1 to i32
    %c0_i32_0 = arith.constant 0 : i32
    %2 = arith.cmpi ne, %1, %c0_i32_0 : i32
    scf.if %2 {
      %c0_8 = arith.constant 0 : index
      %c0_9 = arith.constant 0 : index
      %10 = vector.load %arg2[%c0_8, %c0_9] : memref<16x128xf32, #tpu.memory_space<vmem>>, vector<16x128xf32>
      %c0_10 = arith.constant 0 : index
      %c0_11 = arith.constant 0 : index
      %11 = vector.load %arg4[%c0_10, %c0_11] : memref<128x128xf32, #tpu.memory_space<vmem>>, vector<128x128xf32>
      %cst_12 = arith.constant dense<0.000000e+00> : vector<16x128xf32>
      %12 = tpu.matmul %10, %11, %cst_12 {dimension_numbers = #tpu.dot_dimension_numbers<[1], [0], [0], [1], [0, 0, 1, 1], [], []>} : vector<16x128xf32>, vector<128x128xf32>, vector<16x128xf32> -> vector<16x128xf32>
      %c0_13 = arith.constant 0 : index
      %c0_14 = arith.constant 0 : index
      %13 = vector.load %arg5[%c0_13, %c0_14] : memref<1x128xf32, #tpu.memory_space<vmem>>, vector<1x128xf32>
      %14 = vector.broadcast %13 : vector<1x128xf32> to vector<16x128xf32>
      %15 = arith.addf %12, %14 : vector<16x128xf32>
      %cst_15 = arith.constant 5.000000e-01 : f32
      %16 = vector.broadcast %cst_15 : f32 to vector<16x128xf32>
      %17 = arith.mulf %16, %15 : vector<16x128xf32>
      %cst_16 = arith.constant 0.707106769 : f32
      %18 = vector.broadcast %cst_16 : f32 to vector<16x128xf32>
      %19 = arith.mulf %15, %18 : vector<16x128xf32>
      %20 = math.erf %19 : vector<16x128xf32>
      %cst_17 = arith.constant 1.000000e+00 : f32
      %21 = vector.broadcast %cst_17 : f32 to vector<16x128xf32>
      %22 = arith.addf %21, %20 : vector<16x128xf32>
      %23 = arith.mulf %17, %22 : vector<16x128xf32>
      %cst_18 = arith.constant dense<0.000000e+00> : vector<16xf32>
      %24 = vector.multi_reduction <add>, %23, %cst_18 [1] : vector<16x128xf32> to vector<16xf32>
      %25 = vector.shape_cast %24 : vector<16xf32> to vector<16x1xf32>
      %cst_19 = arith.constant 7.812500e-03 : f32
      %26 = vector.broadcast %cst_19 : f32 to vector<16x1xf32>
      %27 = arith.mulf %25, %26 : vector<16x1xf32>
      %28 = arith.mulf %23, %23 : vector<16x128xf32>
      %cst_20 = arith.constant dense<0.000000e+00> : vector<16xf32>
      %29 = vector.multi_reduction <add>, %28, %cst_20 [1] : vector<16x128xf32> to vector<16xf32>
      %30 = vector.shape_cast %29 : vector<16xf32> to vector<16x1xf32>
      %cst_21 = arith.constant 7.812500e-03 : f32
      %31 = vector.broadcast %cst_21 : f32 to vector<16x1xf32>
      %32 = arith.mulf %30, %31 : vector<16x1xf32>
      %33 = arith.mulf %27, %27 : vector<16x1xf32>
      %34 = arith.subf %32, %33 : vector<16x1xf32>
      %cst_22 = arith.constant 0.000000e+00 : f32
      %35 = vector.broadcast %cst_22 : f32 to vector<16x1xf32>
      %36 = arith.maximumf %34, %35 : vector<16x1xf32>
      %cst_23 = arith.constant 9.99999996E-13 : f32
      %37 = vector.broadcast %cst_23 : f32 to vector<16x1xf32>
      %38 = arith.addf %36, %37 : vector<16x1xf32>
      %39 = math.rsqrt %38 : vector<16x1xf32>
      %40 = vector.broadcast %27 : vector<16x1xf32> to vector<16x128xf32>
      %41 = arith.subf %23, %40 : vector<16x128xf32>
      %42 = vector.broadcast %39 : vector<16x1xf32> to vector<16x128xf32>
      %43 = arith.mulf %41, %42 : vector<16x128xf32>
      %c0_24 = arith.constant 0 : index
      %c0_25 = arith.constant 0 : index
      %44 = vector.load %arg6[%c0_24, %c0_25] : memref<1x128xf32, #tpu.memory_space<vmem>>, vector<1x128xf32>
      %45 = vector.broadcast %44 : vector<1x128xf32> to vector<16x128xf32>
      %46 = arith.mulf %43, %45 : vector<16x128xf32>
      %c0_26 = arith.constant 0 : index
      %c0_27 = arith.constant 0 : index
      %47 = vector.load %arg7[%c0_26, %c0_27] : memref<1x128xf32, #tpu.memory_space<vmem>>, vector<1x128xf32>
      %48 = vector.broadcast %47 : vector<1x128xf32> to vector<16x128xf32>
      %49 = arith.addf %46, %48 : vector<16x128xf32>
      %c0_28 = arith.constant 0 : index
      %c0_29 = arith.constant 0 : index
      %50 = vector.load %arg11[%c0_28, %c0_29] : memref<16x136xf32, #tpu.memory_space<vmem>>, vector<16x128xf32>
      tpu.vector_store %arg11[%c0_28, %c0_29], %49 {strides = array<i32>} : memref<16x136xf32, #tpu.memory_space<vmem>>, vector<16x128xf32>,
      %c0_30 = arith.constant 0 : index
      %c0_31 = arith.constant 0 : index
      %51 = vector.load %arg3[%c0_30, %c0_31] : memref<16x8xf32, #tpu.memory_space<vmem>>, vector<16x8xf32>
      %c0_32 = arith.constant 0 : index
      %c128 = arith.constant 128 : index
      %52 = vector.load %arg11[%c0_32, %c128] : memref<16x136xf32, #tpu.memory_space<vmem>>, vector<16x8xf32>
      tpu.vector_store %arg11[%c0_32, %c128], %51 {strides = array<i32>} : memref<16x136xf32, #tpu.memory_space<vmem>>, vector<16x8xf32>,
    } else {
    }
    %c0 = arith.constant 0 : index
    %c0_1 = arith.constant 0 : index
    %3 = vector.load %arg11[%c0, %c0_1] : memref<16x136xf32, #tpu.memory_space<vmem>>, vector<16x136xf32>
    %c0_2 = arith.constant 0 : index
    %c0_3 = arith.constant 0 : index
    %4 = vector.load %arg8[%c0_2, %c0_3] : memref<136x512xf32, #tpu.memory_space<vmem>>, vector<136x512xf32>
    %cst = arith.constant dense<0.000000e+00> : vector<16x512xf32>
    %5 = tpu.matmul %3, %4, %cst {dimension_numbers = #tpu.dot_dimension_numbers<[1], [0], [0], [1], [0, 0, 1, 1], [], []>} : vector<16x136xf32>, vector<136x512xf32>, vector<16x512xf32> -> vector<16x512xf32>
    %c0_4 = arith.constant 0 : index
    %c0_5 = arith.constant 0 : index
    %6 = vector.load %arg9[%c0_4, %c0_5] : memref<1x512xf32, #tpu.memory_space<vmem>>, vector<1x512xf32>
    %7 = vector.broadcast %6 : vector<1x512xf32> to vector<16x512xf32>
    %8 = arith.addf %5, %7 : vector<16x512xf32>
    %c0_6 = arith.constant 0 : index
    %c0_7 = arith.constant 0 : index
    %9 = vector.load %arg10[%c0_6, %c0_7] : memref<16x512xf32, #tpu.memory_space<vmem>>, vector<16x512xf32>
    tpu.vector_store %arg10[%c0_6, %c0_7], %8 {strides = array<i32>} : memref<16x512xf32, #tpu.memory_space<vmem>>, vector<16x512xf32>,
    return
  }
  func.func @transform_0(%arg0: i32, %arg1: i32) -> (i32, i32) {
    %c0_i32 = arith.constant 0 : i32
    %c0_i32_0 = arith.constant 0 : i32
    return %arg0, %c0_i32 : i32, i32
  }
  func.func @transform_1(%arg0: i32, %arg1: i32) -> (i32, i32) {
    %c0_i32 = arith.constant 0 : i32
    %c0_i32_0 = arith.constant 0 : i32
    return %arg0, %c0_i32 : i32, i32
  }
  func.func @transform_2(%arg0: i32, %arg1: i32) -> (i32, i32) {
    %c0_i32 = arith.constant 0 : i32
    %c0_i32_0 = arith.constant 0 : i32
    %c0_i32_1 = arith.constant 0 : i32
    return %c0_i32, %c0_i32_0 : i32, i32
  }
  func.func @transform_3(%arg0: i32, %arg1: i32) -> (i32, i32) {
    %c0_i32 = arith.constant 0 : i32
    %c0_i32_0 = arith.constant 0 : i32
    %c0_i32_1 = arith.constant 0 : i32
    return %c0_i32, %c0_i32_0 : i32, i32
  }
  func.func @transform_4(%arg0: i32, %arg1: i32) -> (i32, i32) {
    %c0_i32 = arith.constant 0 : i32
    %c0_i32_0 = arith.constant 0 : i32
    %c0_i32_1 = arith.constant 0 : i32
    return %c0_i32, %c0_i32_0 : i32, i32
  }
  func.func @transform_5(%arg0: i32, %arg1: i32) -> (i32, i32) {
    %c0_i32 = arith.constant 0 : i32
    %c0_i32_0 = arith.constant 0 : i32
    %c0_i32_1 = arith.constant 0 : i32
    return %c0_i32, %c0_i32_0 : i32, i32
  }
  func.func @transform_6(%arg0: i32, %arg1: i32) -> (i32, i32) {
    %c0_i32 = arith.constant 0 : i32
    %c0_i32_0 = arith.constant 0 : i32
    return %c0_i32, %arg1 : i32, i32
  }
  func.func @transform_7(%arg0: i32, %arg1: i32) -> (i32, i32) {
    %c0_i32 = arith.constant 0 : i32
    %c0_i32_0 = arith.constant 0 : i32
    return %c0_i32, %arg1 : i32, i32
  }
  func.func @transform_8(%arg0: i32, %arg1: i32) -> (i32, i32) {
    %c0_i32 = arith.constant 0 : i32
    return %arg0, %arg1 : i32, i32
  }
}

</mosaic_0001>

<llo_original>
// kernel: tpu_custom_call.1
$region0: #{tpu_custom_call.1}
  #allocation0 [shape = 'u32[]', space=smem, size = 0x4, offset = 0x4, fixed_abs, tag = 'smem constant byte address 0x4 - core index']
  #allocation1 [shape = 'u32[144,128]{1,0:T(1,128)}', space=vmem, size = 0x12000, scoped, tag = 'internal scratch']
  #allocation2 [shape = 'f32[16,136]{1,0:T(8,128)}', space=vmem, size = 0x4000, scoped, tag = 'scratch operand']
  %s0 = inlined_call_operand.vmem [shape: f32[16,128], index: 0, kind: input, shape index: {}]
  %s1 = inlined_call_operand.vmem [shape: f32[16,8], index: 1, kind: input, shape index: {}]
  %s2 = inlined_call_operand.hbm [shape: f32[128,128], index: 2, kind: input, shape index: {}]
  %s3 = inlined_call_operand.vmem [shape: f32[1,128], index: 3, kind: input, shape index: {}]
  %s4 = inlined_call_operand.vmem [shape: f32[1,128], index: 4, kind: input, shape index: {}]
  %s5 = inlined_call_operand.vmem [shape: f32[1,128], index: 5, kind: input, shape index: {}]
  %s6 = inlined_call_operand.hbm [shape: f32[136,512], index: 6, kind: input, shape index: {}]
  %s7 = inlined_call_operand.vmem [shape: f32[1,512], index: 7, kind: input, shape index: {}]
  %s8 = inlined_call_operand.hbm [shape: f32[16,512], index: 8, kind: output, shape index: {}]
  %s9 = sld [smem:[#allocation0]]
  $region54: #{tpu_custom_call.1} parent=0
    _
  %s11 = ssub.s32 1, %s9
  %s12 = scalar_select 0, %s11, %s9
  $region1: #{tpu_custom_call.1} parent=0
    #allocation3 [shape = 'u8[65536]{0}', space=vmem, size = 0x10000, scoped, tag = 'input window, operand 2, single buffered']
    #allocation4 [shape = 's32[1]{0}', space=sflag, size = 0x4, scoped, tag = 'scoped memory for tpu_custom_call.1']
    #allocation5 [shape = 's32[1]{0}', space=sflag, size = 0x4, scoped, tag = 'scoped memory for tpu_custom_call.1']
    #allocation6 [shape = 'u8[278528]{0}', space=vmem, size = 0x44000, scoped, tag = 'input window, operand 6, single buffered']
    #allocation7 [shape = 's32[1]{0}', space=sflag, size = 0x4, scoped, tag = 'scoped memory for tpu_custom_call.1']
    #allocation8 [shape = 'u8[32768]{0}', space=vmem, size = 0x8000, scoped, tag = 'output window, operand 0, single buffered']
    %13 = vsyncpa [#allocation4], 0
    %14 = vsyncpa [#allocation7], 0
    %15 = vsyncpa [#allocation5], 0
    // Predicated region
    $region2: #{tpu_custom_call.1} parent=1 // pred_check
      _
    $region3: #{tpu_custom_call.1} parent=1 // pred_check_branch
      %17 = sbr.rel (0) target = $region5
    $region4: #{tpu_custom_call.1} parent=1 // pred_region
      _
    $region5: #{tpu_custom_call.1} parent=1 // pred_fallthru
      _
    // Predicated region
    $region6: #{tpu_custom_call.1} parent=1 // pred_check
      _
    $region7: #{tpu_custom_call.1} parent=1 // pred_check_branch
      %19 = sbr.rel (0) target = $region9
    $region8: #{tpu_custom_call.1} parent=1 // pred_region
      _
    $region9: #{tpu_custom_call.1} parent=1 // pred_fallthru
      _
    // Predicated region
    $region10: #{tpu_custom_call.1} parent=1 // pred_check
      _
    $region11: #{tpu_custom_call.1} parent=1 // pred_check_branch
      %21 = sbr.rel (0) target = $region13
    $region12: #{tpu_custom_call.1} parent=1 // pred_region
      %s23 = ssub.s32 2048, 2048
      %24 = vsyncadd [#allocation4], %s23
      %s25 = sshll.u32 [#allocation3], 4
      %s26 = int_to_ptr.vmem [resolvable:$true] %s25
      %31 = dma.hbm_to_vmem [thread:$0]  %s2, 2048, %s26, [#allocation4], 128, 128, 8
    $region13: #{tpu_custom_call.1} parent=1 // pred_fallthru
      _
    // Predicated region
    $region14: #{tpu_custom_call.1} parent=1 // pred_check
      _
    $region15: #{tpu_custom_call.1} parent=1 // pred_check_branch
      %33 = sbr.rel (0) target = $region17
    $region16: #{tpu_custom_call.1} parent=1 // pred_region
      _
    $region17: #{tpu_custom_call.1} parent=1 // pred_fallthru
      _
    // Predicated region
    $region18: #{tpu_custom_call.1} parent=1 // pred_check
      _
    $region19: #{tpu_custom_call.1} parent=1 // pred_check_branch
      %35 = sbr.rel (0) target = $region21
    $region20: #{tpu_custom_call.1} parent=1 // pred_region
      _
    $region21: #{tpu_custom_call.1} parent=1 // pred_fallthru
      _
    // Predicated region
    $region22: #{tpu_custom_call.1} parent=1 // pred_check
      _
    $region23: #{tpu_custom_call.1} parent=1 // pred_check_branch
      %37 = sbr.rel (0) target = $region25
    $region24: #{tpu_custom_call.1} parent=1 // pred_region
      _
    $region25: #{tpu_custom_call.1} parent=1 // pred_fallthru
      _
    // Predicated region
    $region26: #{tpu_custom_call.1} parent=1 // pred_check
      _
    $region27: #{tpu_custom_call.1} parent=1 // pred_check_branch
      %39 = sbr.rel (0) target = $region29
    $region28: #{tpu_custom_call.1} parent=1 // pred_region
      %s41 = ssub.s32 8704, 8704
      %42 = vsyncadd [#allocation7], %s41
      %s43 = sshll.u32 [#allocation6], 4
      %s44 = int_to_ptr.vmem [resolvable:$true] %s43
      %49 = dma.hbm_to_vmem [thread:$0]  %s6, 8704, %s44, [#allocation7], 512, 512, 32
    $region29: #{tpu_custom_call.1} parent=1 // pred_fallthru
      _
    // Predicated region
    $region30: #{tpu_custom_call.1} parent=1 // pred_check
      _
    $region31: #{tpu_custom_call.1} parent=1 // pred_check_branch
      %51 = sbr.rel (0) target = $region33
    $region32: #{tpu_custom_call.1} parent=1 // pred_region
      _
    $region33: #{tpu_custom_call.1} parent=1 // pred_fallthru
      _
    // Predicated region
    $region34: #{tpu_custom_call.1} parent=1 // pred_check
      _
    $region35: #{tpu_custom_call.1} parent=1 // pred_check_branch
      %53 = sbr.rel (0) target = $region37
    $region36: #{tpu_custom_call.1} parent=1 // pred_region
      %54 = dma.done [#allocation4], 2048
    $region37: #{tpu_custom_call.1} parent=1 // pred_fallthru
      _
    // Predicated region
    $region38: #{tpu_custom_call.1} parent=1 // pred_check
      _
    $region39: #{tpu_custom_call.1} parent=1 // pred_check_branch
      %56 = sbr.rel (0) target = $region41
    $region40: #{tpu_custom_call.1} parent=1 // pred_region
      %57 = dma.done [#allocation7], 8704
    $region41: #{tpu_custom_call.1} parent=1 // pred_fallthru
      _
    %p58 = scmp.eq.s32.totalorder 0, 0
    // Predicated region
    $region42: #{tpu_custom_call.1} parent=1 // pred_check
      %p59 = pneg %p58
    $region43: #{tpu_custom_call.1} parent=1 // pred_check_branch
      %61 = sbr.rel (%p59) target = $region45
    $region44: #{tpu_custom_call.1} parent=1 // pred_region
      %v62 = vld [vmem:[%s0] sm:$0xff]
      %v63 = vld [vmem:[%s0 + $0x8] sm:$0xff]
      %v64 = vld [vmem:[#allocation3] sm:$0xff]
      %v65 = vld [vmem:[#allocation3 + $0x8] sm:$0xff]
      %v66 = vld [vmem:[#allocation3 + $0x10] sm:$0xff]
      %v67 = vld [vmem:[#allocation3 + $0x18] sm:$0xff]
      %v68 = vld [vmem:[#allocation3 + $0x20] sm:$0xff]
      %v69 = vld [vmem:[#allocation3 + $0x28] sm:$0xff]
      %v70 = vld [vmem:[#allocation3 + $0x30] sm:$0xff]
      %v71 = vld [vmem:[#allocation3 + $0x38] sm:$0xff]
      %v72 = vld [vmem:[#allocation3 + $0x40] sm:$0xff]
      %v73 = vld [vmem:[#allocation3 + $0x48] sm:$0xff]
      %v74 = vld [vmem:[#allocation3 + $0x50] sm:$0xff]
      %v75 = vld [vmem:[#allocation3 + $0x58] sm:$0xff]
      %v76 = vld [vmem:[#allocation3 + $0x60] sm:$0xff]
      %v77 = vld [vmem:[#allocation3 + $0x68] sm:$0xff]
      %v78 = vld [vmem:[#allocation3 + $0x70] sm:$0xff]
      %v79 = vld [vmem:[#allocation3 + $0x78] sm:$0xff]
      %v80 = vld [vmem:[%s3] sm:$0x1]
      %v82 = vlaneseq
      %v83 = vshrl.u32 %v82, 7
      %v84 = vsub.s32 0, %v83
      %v85 = vrot.slane %v80, %v84
      %87 = vmatprep.subr.mxu0 0.0
      %88 = vmatpush1.msra.mxu0 %v79
      %89 = vmatprep.subr.mxu0 0.0
      %90 = vmatpush1.msra.mxu0 %v78
      %91 = vmatprep.subr.mxu0 0.0
      %92 = vmatpush1.msra.mxu0 %v77
      %93 = vmatprep.subr.mxu0 0.0
      %94 = vmatpush1.msra.mxu0 %v76
      %95 = vmatprep.subr.mxu0 0.0
      %96 = vmatpush1.msra.mxu0 %v75
      %97 = vmatprep.subr.mxu0 0.0
      %98 = vmatpush1.msra.mxu0 %v74
      %99 = vmatprep.subr.mxu0 0.0
      %100 = vmatpush1.msra.mxu0 %v73
      %101 = vmatprep.subr.mxu0 0.0
      %102 = vmatpush1.msra.mxu0 %v72
      %103 = vmatprep.subr.mxu0 0.0
      %104 = vmatpush1.msra.mxu0 %v71
      %105 = vmatprep.subr.mxu0 0.0
      %106 = vmatpush1.msra.mxu0 %v70
      %107 = vmatprep.subr.mxu0 0.0
      %108 = vmatpush1.msra.mxu0 %v69
      %109 = vmatprep.subr.mxu0 0.0
      %110 = vmatpush1.msra.mxu0 %v68
      %111 = vmatprep.subr.mxu0 0.0
      %112 = vmatpush1.msra.mxu0 %v67
      %113 = vmatprep.subr.mxu0 0.0
      %114 = vmatpush1.msra.mxu0 %v66
      %115 = vmatprep.subr.mxu0 0.0
      %116 = vmatpush1.msra.mxu0 %v65
      %117 = vmatprep.subr.mxu0 0.0
      %118 = vmatpush1.msra.mxu0 %v64
      %119 = vmatprep.subr.mxu0 0.0
      %120 = vmatpush2.msra.mxu0 0.0
      %121 = vmatprep.subr.mxu0 0.0
      %122 = vmatpush2.msra.mxu0 0.0
      %123 = vmatprep.subr.mxu0 0.0
      %124 = vmatpush2.msra.mxu0 0.0
      %125 = vmatprep.subr.mxu0 0.0
      %126 = vmatpush2.msra.mxu0 0.0
      %127 = vmatprep.subr.mxu0 0.0
      %128 = vmatpush2.msra.mxu0 0.0
      %129 = vmatprep.subr.mxu0 0.0
      %130 = vmatpush2.msra.mxu0 0.0
      %131 = vmatprep.subr.mxu0 0.0
      %132 = vmatpush2.msra.mxu0 0.0
      %133 = vmatprep.subr.mxu0 0.0
      %134 = vmatpush2.msra.mxu0 0.0
      %135 = vmatprep.subr.mxu0 0.0
      %136 = vmatpush2.msra.mxu0 0.0
      %137 = vmatprep.subr.mxu0 0.0
      %138 = vmatpush2.msra.mxu0 0.0
      %139 = vmatprep.subr.mxu0 0.0
      %140 = vmatpush2.msra.mxu0 0.0
      %141 = vmatprep.subr.mxu0 0.0
      %142 = vmatpush2.msra.mxu0 0.0
      %143 = vmatprep.subr.mxu0 0.0
      %144 = vmatpush2.msra.mxu0 0.0
      %145 = vmatprep.subr.mxu0 0.0
      %146 = vmatpush2.msra.mxu0 0.0
      %147 = vmatprep.subr.mxu0 0.0
      %148 = vmatpush2.msra.mxu0 0.0
      %149 = vmatprep.subr.mxu0 0.0
      %150 = vmatpush2.msra.mxu0 0.0
      %151 = vmatprep.mubr.f32.mxu0 0.0
      %152 = vmatmul.mubr.f32.gmra.mxu0 %v62
      %v153 = vpop.f32.mrf.mxu0
      %v154 = vadd.f32 %v85, %v153
      %v155 = vpop.f32.mrf.mxu0
      %156 = vmatprep.mubr.f32.mxu0 0.0
      %157 = vmatmul.mubr.f32.gmra.mxu0 %v63
      %v158 = vpop.f32.mrf.mxu0
      %v159 = vadd.f32 %v85, %v158
      %v160 = vpop.f32.mrf.mxu0
      %161 = vdwg.mxu0
      %v162 = vmul.f32 %v154, 0.5
      %v163 = vmul.f32 %v159, 0.5
      %v164 = vmul.f32 %v154, 0.70710677
      %v165 = vmul.f32 %v159, 0.70710677
      %v166 = verf.f32.pop %v164
      %v167 = verf.f32.pop %v165
      %v168 = vadd.f32 %v166, 1.0
      %v169 = vadd.f32 %v167, 1.0
      %v170 = vmul.f32 %v162, %v168
      %v171 = vmul.f32 %v163, %v169
      %172 = vadd.xlane.f32.xlu0 %v170
      %v173 = vpop.xlane.xlu0 %172
      %174 = vadd.xlane.f32.xlu0 %v171
      %v175 = vpop.xlane.xlu0 %174
      %v176 = vmul.f32 %v173, 0.0078125
      %v177 = vmul.f32 %v175, 0.0078125
      %v178 = vmul.f32 %v170, %v170
      %v179 = vmul.f32 %v171, %v171
      %180 = vadd.xlane.f32.xlu0 %v178
      %v181 = vpop.xlane.xlu0 %180
      %182 = vadd.xlane.f32.xlu0 %v179
      %v183 = vpop.xlane.xlu0 %182
      %v184 = vmul.f32 %v181, 0.0078125
      %v185 = vmul.f32 %v183, 0.0078125
      %v186 = vmul.f32 %v176, %v176
      %v187 = vmul.f32 %v177, %v177
      %v188 = vsub.f32 %v184, %v186
      %v189 = vsub.f32 %v185, %v187
      %v190 = vmax.f32 %v188, 0.0
      %v191 = vmax.f32 %v189, 0.0
      %v192 = vadd.f32 %v190, 1e-12
      %v193 = vadd.f32 %v191, 1e-12
      %v194 = vrsqrt.pop %v192
      %v195 = vrsqrt.pop %v193
      %v196 = vsub.f32 %v170, %v176
      %v197 = vsub.f32 %v171, %v177
      %v198 = vmul.f32 %v196, %v194
      %v199 = vmul.f32 %v197, %v195
      %v200 = vld [vmem:[%s4] sm:$0x1]
      %v202 = vlaneseq
      %v203 = vshrl.u32 %v202, 7
      %v204 = vsub.s32 0, %v203
      %v205 = vrot.slane %v200, %v204
      %v207 = vmul.f32 %v198, %v205
      %v208 = vmul.f32 %v199, %v205
      %v209 = vld [vmem:[%s5] sm:$0x1]
      %v211 = vlaneseq
      %v212 = vshrl.u32 %v211, 7
      %v213 = vsub.s32 0, %v212
      %v214 = vrot.slane %v209, %v213
      %v216 = vadd.f32 %v207, %v214
      %v217 = vadd.f32 %v208, %v214
      %218 = vst [vmem:[#allocation2] sm:$0xff] %v216
      %219 = vst [vmem:[#allocation2 + $0x10] sm:$0xff] %v217
      %v220 = vld [vmem:[%s1] sm:$0xff]
      %v221 = vld [vmem:[%s1 + $0x8] sm:$0xff]
      %vm222 = vcmask 64512
      %223 = vst.msk [vmem:[#allocation2 + $0x8] sm:$0xff] %vm222, %v220
      %224 = vst.msk [vmem:[#allocation2 + $0x18] sm:$0xff] %vm222, %v221
    $region45: #{tpu_custom_call.1} parent=1 // pred_fallthru
      _
    %v225 = vld [vmem:[#allocation2] sm:$0xff]
    %v226 = vld [vmem:[#allocation2 + $0x8] sm:$0xff]
    %v227 = vld [vmem:[#allocation2 + $0x10] sm:$0xff]
    %v228 = vld [vmem:[#allocation2 + $0x18] sm:$0xff]
    %v229 = vld [vmem:[#allocation6] sm:$0xff]
    %v230 = vld [vmem:[#allocation6 + $0x8] sm:$0xff]
    %v231 = vld [vmem:[#allocation6 + $0x10] sm:$0xff]
    %v232 = vld [vmem:[#allocation6 + $0x18] sm:$0xff]
    %v233 = vld [vmem:[#allocation6 + $0x20] sm:$0xff]
    %v234 = vld [vmem:[#allocation6 + $0x28] sm:$0xff]
    %v235 = vld [vmem:[#allocation6 + $0x30] sm:$0xff]
    %v236 = vld [vmem:[#allocation6 + $0x38] sm:$0xff]
    %v237 = vld [vmem:[#allocation6 + $0x40] sm:$0xff]
    %v238 = vld [vmem:[#allocation6 + $0x48] sm:$0xff]
    %v239 = vld [vmem:[#allocation6 + $0x50] sm:$0xff]
    %v240 = vld [vmem:[#allocation6 + $0x58] sm:$0xff]
    %v241 = vld [vmem:[#allocation6 + $0x60] sm:$0xff]
    %v242 = vld [vmem:[#allocation6 + $0x68] sm:$0xff]
    %v243 = vld [vmem:[#allocation6 + $0x70] sm:$0xff]
    %v244 = vld [vmem:[#allocation6 + $0x78] sm:$0xff]
    %v245 = vld [vmem:[#allocation6 + $0x80] sm:$0xff]
    %v246 = vld [vmem:[#allocation6 + $0x88] sm:$0xff]
    %v247 = vld [vmem:[#allocation6 + $0x90] sm:$0xff]
    %v248 = vld [vmem:[#allocation6 + $0x98] sm:$0xff]
    %v249 = vld [vmem:[#allocation6 + $0xa0] sm:$0xff]
    %v250 = vld [vmem:[#allocation6 + $0xa8] sm:$0xff]
    %v251 = vld [vmem:[#allocation6 + $0xb0] sm:$0xff]
    %v252 = vld [vmem:[#allocation6 + $0xb8] sm:$0xff]
    %v253 = vld [vmem:[#allocation6 + $0xc0] sm:$0xff]
    %v254 = vld [vmem:[#allocation6 + $0xc8] sm:$0xff]
    %v255 = vld [vmem:[#allocation6 + $0xd0] sm:$0xff]
    %v256 = vld [vmem:[#allocation6 + $0xd8] sm:$0xff]
    %v257 = vld [vmem:[#allocation6 + $0xe0] sm:$0xff]
    %v258 = vld [vmem:[#allocation6 + $0xe8] sm:$0xff]
    %v259 = vld [vmem:[#allocation6 + $0xf0] sm:$0xff]
    %v260 = vld [vmem:[#allocation6 + $0xf8] sm:$0xff]
    %v261 = vld [vmem:[#allocation6 + $0x100] sm:$0xff]
    %v262 = vld [vmem:[#allocation6 + $0x108] sm:$0xff]
    %v263 = vld [vmem:[#allocation6 + $0x110] sm:$0xff]
    %v264 = vld [vmem:[#allocation6 + $0x118] sm:$0xff]
    %v265 = vld [vmem:[#allocation6 + $0x120] sm:$0xff]
    %v266 = vld [vmem:[#allocation6 + $0x128] sm:$0xff]
    %v267 = vld [vmem:[#allocation6 + $0x130] sm:$0xff]
    %v268 = vld [vmem:[#allocation6 + $0x138] sm:$0xff]
    %v269 = vld [vmem:[#allocation6 + $0x140] sm:$0xff]
    %v270 = vld [vmem:[#allocation6 + $0x148] sm:$0xff]
    %v271 = vld [vmem:[#allocation6 + $0x150] sm:$0xff]
    %v272 = vld [vmem:[#allocation6 + $0x158] sm:$0xff]
    %v273 = vld [vmem:[#allocation6 + $0x160] sm:$0xff]
    %v274 = vld [vmem:[#allocation6 + $0x168] sm:$0xff]
    %v275 = vld [vmem:[#allocation6 + $0x170] sm:$0xff]
    %v276 = vld [vmem:[#allocation6 + $0x178] sm:$0xff]
    %v277 = vld [vmem:[#allocation6 + $0x180] sm:$0xff]
    %v278 = vld [vmem:[#allocation6 + $0x188] sm:$0xff]
    %v279 = vld [vmem:[#allocation6 + $0x190] sm:$0xff]
    %v280 = vld [vmem:[#allocation6 + $0x198] sm:$0xff]
    %v281 = vld [vmem:[#allocation6 + $0x1a0] sm:$0xff]
    %v282 = vld [vmem:[#allocation6 + $0x1a8] sm:$0xff]
    %v283 = vld [vmem:[#allocation6 + $0x1b0] sm:$0xff]
    %v284 = vld [vmem:[#allocation6 + $0x1b8] sm:$0xff]
    %v285 = vld [vmem:[#allocation6 + $0x1c0] sm:$0xff]
    %v286 = vld [vmem:[#allocation6 + $0x1c8] sm:$0xff]
    %v287 = vld [vmem:[#allocation6 + $0x1d0] sm:$0xff]
    %v288 = vld [vmem:[#allocation6 + $0x1d8] sm:$0xff]
    %v289 = vld [vmem:[#allocation6 + $0x1e0] sm:$0xff]
    %v290 = vld [vmem:[#allocation6 + $0x1e8] sm:$0xff]
    %v291 = vld [vmem:[#allocation6 + $0x1f0] sm:$0xff]
    %v292 = vld [vmem:[#allocation6 + $0x1f8] sm:$0xff]
    %v293 = vld [vmem:[#allocation6 + $0x200] sm:$0xff]
    %v294 = vld [vmem:[#allocation6 + $0x208] sm:$0xff]
    %v295 = vld [vmem:[#allocation6 + $0x210] sm:$0xff]
    %v296 = vld [vmem:[#allocation6 + $0x218] sm:$0xff]
    %v297 = vld [vmem:[%s7] sm:$0xf]
    %v299 = vlaneseq
    %v300 = vshrl.u32 %v299, 7
    %v301 = vsub.s32 0, %v300
    %v302 = vrot.slane %v297, %v301
    %v303 = vlaneseq
    %v304 = vshrl.u32 %v303, 7
    %v305 = vsub.s32 1, %v304
    %v306 = vrot.slane %v297, %v305
    %v307 = vlaneseq
    %v308 = vshrl.u32 %v307, 7
    %v309 = vsub.s32 2, %v308
    %v310 = vrot.slane %v297, %v309
    %v311 = vlaneseq
    %v312 = vshrl.u32 %v311, 7
    %v313 = vsub.s32 3, %v312
    %v314 = vrot.slane %v297, %v313
    %vm319 = vcmask 64512
    %v321 = vsel %vm319, %v226, 0
    %v324 = vsel %vm319, %v228, 0
    %326 = vmatprep.subr.mxu0 %v290
    %327 = vmatpush1.msra.mxu0 %v289
    %328 = vmatprep.subr.mxu0 %v286
    %329 = vmatpush1.msra.mxu0 %v285
    %330 = vmatprep.subr.mxu0 %v282
    %331 = vmatpush1.msra.mxu0 %v281
    %332 = vmatprep.subr.mxu0 %v278
    %333 = vmatpush1.msra.mxu0 %v277
    %334 = vmatprep.subr.mxu0 %v274
    %335 = vmatpush1.msra.mxu0 %v273
    %336 = vmatprep.subr.mxu0 %v270
    %337 = vmatpush1.msra.mxu0 %v269
    %338 = vmatprep.subr.mxu0 %v266
    %339 = vmatpush1.msra.mxu0 %v265
    %340 = vmatprep.subr.mxu0 %v262
    %341 = vmatpush1.msra.mxu0 %v261
    %342 = vmatprep.subr.mxu0 %v258
    %343 = vmatpush1.msra.mxu0 %v257
    %344 = vmatprep.subr.mxu0 %v254
    %345 = vmatpush1.msra.mxu0 %v253
    %346 = vmatprep.subr.mxu0 %v250
    %347 = vmatpush1.msra.mxu0 %v249
    %348 = vmatprep.subr.mxu0 %v246
    %349 = vmatpush1.msra.mxu0 %v245
    %350 = vmatprep.subr.mxu0 %v242
    %351 = vmatpush1.msra.mxu0 %v241
    %352 = vmatprep.subr.mxu0 %v238
    %353 = vmatpush1.msra.mxu0 %v237
    %354 = vmatprep.subr.mxu0 %v234
    %355 = vmatpush1.msra.mxu0 %v233
    %356 = vmatprep.subr.mxu0 %v230
    %357 = vmatpush1.msra.mxu0 %v229
    %358 = vmatprep.subr.mxu0 0.0
    %359 = vmatpush2.msra.mxu0 0.0
    %360 = vmatprep.subr.mxu0 0.0
    %361 = vmatpush2.msra.mxu0 0.0
    %362 = vmatprep.subr.mxu0 0.0
    %363 = vmatpush2.msra.mxu0 0.0
    %364 = vmatprep.subr.mxu0 0.0
    %365 = vmatpush2.msra.mxu0 0.0
    %366 = vmatprep.subr.mxu0 0.0
    %367 = vmatpush2.msra.mxu0 0.0
    %368 = vmatprep.subr.mxu0 0.0
    %369 = vmatpush2.msra.mxu0 0.0
    %370 = vmatprep.subr.mxu0 0.0
    %371 = vmatpush2.msra.mxu0 0.0
    %372 = vmatprep.subr.mxu0 0.0
    %373 = vmatpush2.msra.mxu0 0.0
    %374 = vmatprep.subr.mxu0 0.0
    %375 = vmatpush2.msra.mxu0 0.0
    %376 = vmatprep.subr.mxu0 0.0
    %377 = vmatpush2.msra.mxu0 0.0
    %378 = vmatprep.subr.mxu0 0.0
    %379 = vmatpush2.msra.mxu0 0.0
    %380 = vmatprep.subr.mxu0 0.0
    %381 = vmatpush2.msra.mxu0 0.0
    %382 = vmatprep.subr.mxu0 0.0
    %383 = vmatpush2.msra.mxu0 0.0
    %384 = vmatprep.subr.mxu0 0.0
    %385 = vmatpush2.msra.mxu0 0.0
    %386 = vmatprep.subr.mxu0 0.0
    %387 = vmatpush2.msra.mxu0 0.0
    %388 = vmatprep.subr.mxu0 %v294
    %389 = vmatpush2.msra.mxu0 %v293
    %390 = vmatprep.mubr.f32.mxu0 %v321
    %391 = vmatmul.mubr.f32.gmra.mxu0 %v225
    %v392 = vpop.f32.mrf.mxu0
    %v393 = vadd.f32 %v302, %v392
    %v394 = vpop.f32.mrf.mxu0
    %v395 = vadd.f32 %v306, %v394
    %396 = vmatprep.mubr.f32.mxu0 %v324
    %397 = vmatmul.mubr.f32.gmra.mxu0 %v227
    %v398 = vpop.f32.mrf.mxu0
    %v399 = vadd.f32 %v302, %v398
    %v400 = vpop.f32.mrf.mxu0
    %v401 = vadd.f32 %v306, %v400
    %402 = vdwg.mxu0
    %403 = vmatprep.subr.mxu0 %v292
    %404 = vmatpush1.msra.mxu0 %v291
    %405 = vmatprep.subr.mxu0 %v288
    %406 = vmatpush1.msra.mxu0 %v287
    %407 = vmatprep.subr.mxu0 %v284
    %408 = vmatpush1.msra.mxu0 %v283
    %409 = vmatprep.subr.mxu0 %v280
    %410 = vmatpush1.msra.mxu0 %v279
    %411 = vmatprep.subr.mxu0 %v276
    %412 = vmatpush1.msra.mxu0 %v275
    %413 = vmatprep.subr.mxu0 %v272
    %414 = vmatpush1.msra.mxu0 %v271
    %415 = vmatprep.subr.mxu0 %v268
    %416 = vmatpush1.msra.mxu0 %v267
    %417 = vmatprep.subr.mxu0 %v264
    %418 = vmatpush1.msra.mxu0 %v263
    %419 = vmatprep.subr.mxu0 %v260
    %420 = vmatpush1.msra.mxu0 %v259
    %421 = vmatprep.subr.mxu0 %v256
    %422 = vmatpush1.msra.mxu0 %v255
    %423 = vmatprep.subr.mxu0 %v252
    %424 = vmatpush1.msra.mxu0 %v251
    %425 = vmatprep.subr.mxu0 %v248
    %426 = vmatpush1.msra.mxu0 %v247
    %427 = vmatprep.subr.mxu0 %v244
    %428 = vmatpush1.msra.mxu0 %v243
    %429 = vmatprep.subr.mxu0 %v240
    %430 = vmatpush1.msra.mxu0 %v239
    %431 = vmatprep.subr.mxu0 %v236
    %432 = vmatpush1.msra.mxu0 %v235
    %433 = vmatprep.subr.mxu0 %v232
    %434 = vmatpush1.msra.mxu0 %v231
    %435 = vmatprep.subr.mxu0 0.0
    %436 = vmatpush2.msra.mxu0 0.0
    %437 = vmatprep.subr.mxu0 0.0
    %438 = vmatpush2.msra.mxu0 0.0
    %439 = vmatprep.subr.mxu0 0.0
    %440 = vmatpush2.msra.mxu0 0.0
    %441 = vmatprep.subr.mxu0 0.0
    %442 = vmatpush2.msra.mxu0 0.0
    %443 = vmatprep.subr.mxu0 0.0
    %444 = vmatpush2.msra.mxu0 0.0
    %445 = vmatprep.subr.mxu0 0.0
    %446 = vmatpush2.msra.mxu0 0.0
    %447 = vmatprep.subr.mxu0 0.0
    %448 = vmatpush2.msra.mxu0 0.0
    %449 = vmatprep.subr.mxu0 0.0
    %450 = vmatpush2.msra.mxu0 0.0
    %451 = vmatprep.subr.mxu0 0.0
    %452 = vmatpush2.msra.mxu0 0.0
    %453 = vmatprep.subr.mxu0 0.0
    %454 = vmatpush2.msra.mxu0 0.0
    %455 = vmatprep.subr.mxu0 0.0
    %456 = vmatpush2.msra.mxu0 0.0
    %457 = vmatprep.subr.mxu0 0.0
    %458 = vmatpush2.msra.mxu0 0.0
    %459 = vmatprep.subr.mxu0 0.0
    %460 = vmatpush2.msra.mxu0 0.0
    %461 = vmatprep.subr.mxu0 0.0
    %462 = vmatpush2.msra.mxu0 0.0
    %463 = vmatprep.subr.mxu0 0.0
    %464 = vmatpush2.msra.mxu0 0.0
    %465 = vmatprep.subr.mxu0 %v296
    %466 = vmatpush2.msra.mxu0 %v295
    %467 = vmatprep.mubr.f32.mxu0 %v321
    %468 = vmatmul.mubr.f32.gmra.mxu0 %v225
    %v469 = vpop.f32.mrf.mxu0
    %v470 = vadd.f32 %v310, %v469
    %v471 = vpop.f32.mrf.mxu0
    %v472 = vadd.f32 %v314, %v471
    %473 = vmatprep.mubr.f32.mxu0 %v324
    %474 = vmatmul.mubr.f32.gmra.mxu0 %v227
    %v475 = vpop.f32.mrf.mxu0
    %v476 = vadd.f32 %v310, %v475
    %v477 = vpop.f32.mrf.mxu0
    %v478 = vadd.f32 %v314, %v477
    %479 = vdwg.mxu0
    %480 = vst [vmem:[#allocation8] sm:$0xff] %v393
    %481 = vst [vmem:[#allocation8 + $0x8] sm:$0xff] %v395
    %482 = vst [vmem:[#allocation8 + $0x10] sm:$0xff] %v470
    %483 = vst [vmem:[#allocation8 + $0x18] sm:$0xff] %v472
    %484 = vst [vmem:[#allocation8 + $0x20] sm:$0xff] %v399
    %485 = vst [vmem:[#allocation8 + $0x28] sm:$0xff] %v401
    %486 = vst [vmem:[#allocation8 + $0x30] sm:$0xff] %v476
    %487 = vst [vmem:[#allocation8 + $0x38] sm:$0xff] %v478
    // Predicated region
    $region46: #{tpu_custom_call.1} parent=1 // pred_check
      _
    $region47: #{tpu_custom_call.1} parent=1 // pred_check_branch
      %489 = sbr.rel (0) target = $region49
    $region48: #{tpu_custom_call.1} parent=1 // pred_region
      %s491 = ssub.s32 1024, 1024
      %492 = vsyncadd [#allocation5], %s491
      %s493 = sshll.u32 [#allocation8], 4
      %s494 = int_to_ptr.vmem [resolvable:$true] %s493
      %499 = dma.vmem_to_hbm [thread:$0]  %s494, 1024, %s8, [#allocation5], 512, 512, 32
    $region49: #{tpu_custom_call.1} parent=1 // pred_fallthru
      _
    // Predicated region
    $region50: #{tpu_custom_call.1} parent=1 // pred_check
      _
    $region51: #{tpu_custom_call.1} parent=1 // pred_check_branch
      %501 = sbr.rel (0) target = $region53
    $region52: #{tpu_custom_call.1} parent=1 // pred_region
      %502 = dma.done [#allocation5], 1024
    $region53: #{tpu_custom_call.1} parent=1 // pred_fallthru
      _
    %503 = vsyncpa [#allocation4], 1
    %504 = vsyncpa [#allocation7], 1
    %505 = vsyncpa [#allocation5], 1

// kernel: tpu_custom_call.1
$region0: #{tpu_custom_call.1}
  #allocation0 [shape = 'u32[]', space=smem, size = 0x4, offset = 0x4, fixed_abs, tag = 'smem constant byte address 0x4 - core index']
  #allocation1 [shape = 'u32[144,128]{1,0:T(1,128)}', space=vmem, size = 0x12000, scoped, tag = 'internal scratch']
  #allocation2 [shape = 'f32[16,136]{1,0:T(8,128)}', space=vmem, size = 0x4000, scoped, tag = 'scratch operand']
  %s0 = inlined_call_operand.vmem [shape: f32[16,128], index: 0, kind: input, shape index: {}]
  %s1 = inlined_call_operand.vmem [shape: f32[16,8], index: 1, kind: input, shape index: {}]
  %s2 = inlined_call_operand.hbm [shape: f32[128,128], index: 2, kind: input, shape index: {}]
  %s3 = inlined_call_operand.vmem [shape: f32[1,128], index: 3, kind: input, shape index: {}]
  %s4 = inlined_call_operand.vmem [shape: f32[1,128], index: 4, kind: input, shape index: {}]
  %s5 = inlined_call_operand.vmem [shape: f32[1,128], index: 5, kind: input, shape index: {}]
  %s6 = inlined_call_operand.hbm [shape: f32[136,512], index: 6, kind: input, shape index: {}]
  %s7 = inlined_call_operand.vmem [shape: f32[1,512], index: 7, kind: input, shape index: {}]
  %s8 = inlined_call_operand.hbm [shape: f32[16,512], index: 8, kind: output, shape index: {}]
  %s9 = sld [smem:[#allocation0]]
  $region54: #{tpu_custom_call.1} parent=0
    _
  %s11 = ssub.s32 1, %s9
  %s12 = scalar_select 0, %s11, %s9
  $region1: #{tpu_custom_call.1} parent=0
    #allocation3 [shape = 'u8[65536]{0}', space=vmem, size = 0x10000, scoped, tag = 'input window, operand 2, single buffered']
    #allocation4 [shape = 's32[1]{0}', space=sflag, size = 0x4, scoped, tag = 'scoped memory for tpu_custom_call.1']
    #allocation5 [shape = 's32[1]{0}', space=sflag, size = 0x4, scoped, tag = 'scoped memory for tpu_custom_call.1']
    #allocation6 [shape = 'u8[278528]{0}', space=vmem, size = 0x44000, scoped, tag = 'input window, operand 6, single buffered']
    #allocation7 [shape = 's32[1]{0}', space=sflag, size = 0x4, scoped, tag = 'scoped memory for tpu_custom_call.1']
    #allocation8 [shape = 'u8[32768]{0}', space=vmem, size = 0x8000, scoped, tag = 'output window, operand 0, single buffered']
    %13 = vsyncpa [#allocation4], 0
    %14 = vsyncpa [#allocation7], 0
    %15 = vsyncpa [#allocation5], 0
    // Predicated region
    $region2: #{tpu_custom_call.1} parent=1 // pred_check
      _
    $region3: #{tpu_custom_call.1} parent=1 // pred_check_branch
      %17 = sbr.rel (0) target = $region5
    $region4: #{tpu_custom_call.1} parent=1 // pred_region
      _
    $region5: #{tpu_custom_call.1} parent=1 // pred_fallthru
      _
    // Predicated region
    $region6: #{tpu_custom_call.1} parent=1 // pred_check
      _
    $region7: #{tpu_custom_call.1} parent=1 // pred_check_branch
      %19 = sbr.rel (0) target = $region9
    $region8: #{tpu_custom_call.1} parent=1 // pred_region
      _
    $region9: #{tpu_custom_call.1} parent=1 // pred_fallthru
      _
    // Predicated region
    $region10: #{tpu_custom_call.1} parent=1 // pred_check
      _
    $region11: #{tpu_custom_call.1} parent=1 // pred_check_branch
      %21 = sbr.rel (0) target = $region13
    $region12: #{tpu_custom_call.1} parent=1 // pred_region
      %s23 = ssub.s32 2048, 2048
      %24 = vsyncadd [#allocation4], %s23
      %s25 = sshll.u32 [#allocation3], 4
      %s26 = int_to_ptr.vmem [resolvable:$true] %s25
      %31 = dma.hbm_to_vmem [thread:$0]  %s2, 2048, %s26, [#allocation4], 128, 128, 8
    $region13: #{tpu_custom_call.1} parent=1 // pred_fallthru
      _
    // Predicated region
    $region14: #{tpu_custom_call.1} parent=1 // pred_check
      _
    $region15: #{tpu_custom_call.1} parent=1 // pred_check_branch
      %33 = sbr.rel (0) target = $region17
    $region16: #{tpu_custom_call.1} parent=1 // pred_region
      _
    $region17: #{tpu_custom_call.1} parent=1 // pred_fallthru
      _
    // Predicated region
    $region18: #{tpu_custom_call.1} parent=1 // pred_check
      _
    $region19: #{tpu_custom_call.1} parent=1 // pred_check_branch
      %35 = sbr.rel (0) target = $region21
    $region20: #{tpu_custom_call.1} parent=1 // pred_region
      _
    $region21: #{tpu_custom_call.1} parent=1 // pred_fallthru
      _
    // Predicated region
    $region22: #{tpu_custom_call.1} parent=1 // pred_check
      _
    $region23: #{tpu_custom_call.1} parent=1 // pred_check_branch
      %37 = sbr.rel (0) target = $region25
    $region24: #{tpu_custom_call.1} parent=1 // pred_region
      _
    $region25: #{tpu_custom_call.1} parent=1 // pred_fallthru
      _
    // Predicated region
    $region26: #{tpu_custom_call.1} parent=1 // pred_check
      _
    $region27: #{tpu_custom_call.1} parent=1 // pred_check_branch
      %39 = sbr.rel (0) target = $region29
    $region28: #{tpu_custom_call.1} parent=1 // pred_region
      %s41 = ssub.s32 8704, 8704
      %42 = vsyncadd [#allocation7], %s41
      %s43 = sshll.u32 [#allocation6], 4
      %s44 = int_to_ptr.vmem [resolvable:$true] %s43
      %49 = dma.hbm_to_vmem [thread:$0]  %s6, 8704, %s44, [#allocation7], 512, 512, 32
    $region29: #{tpu_custom_call.1} parent=1 // pred_fallthru
      _
    // Predicated region
    $region30: #{tpu_custom_call.1} parent=1 // pred_check
      _
    $region31: #{tpu_custom_call.1} parent=1 // pred_check_branch
      %51 = sbr.rel (0) target = $region33
    $region32: #{tpu_custom_call.1} parent=1 // pred_region
      _
    $region33: #{tpu_custom_call.1} parent=1 // pred_fallthru
      _
    // Predicated region
    $region34: #{tpu_custom_call.1} parent=1 // pred_check
      _
    $region35: #{tpu_custom_call.1} parent=1 // pred_check_branch
      %53 = sbr.rel (0) target = $region37
    $region36: #{tpu_custom_call.1} parent=1 // pred_region
      %54 = dma.done [#allocation4], 2048
    $region37: #{tpu_custom_call.1} parent=1 // pred_fallthru
      _
    // Predicated region
    $region38: #{tpu_custom_call.1} parent=1 // pred_check
      _
    $region39: #{tpu_custom_call.1} parent=1 // pred_check_branch
      %56 = sbr.rel (0) target = $region41
    $region40: #{tpu_custom_call.1} parent=1 // pred_region
      %57 = dma.done [#allocation7], 8704
    $region41: #{tpu_custom_call.1} parent=1 // pred_fallthru
      _
    %p58 = scmp.eq.s32.totalorder 0, 0
    // Predicated region
    $region42: #{tpu_custom_call.1} parent=1 // pred_check
      %p59 = pneg %p58
    $region43: #{tpu_custom_call.1} parent=1 // pred_check_branch
      %61 = sbr.rel (%p59) target = $region45
    $region44: #{tpu_custom_call.1} parent=1 // pred_region
      %v62 = vld [vmem:[%s0] sm:$0xff]
      %v63 = vld [vmem:[%s0 + $0x8] sm:$0xff]
      %v64 = vld [vmem:[#allocation3] sm:$0xff]
      %v65 = vld [vmem:[#allocation3 + $0x8] sm:$0xff]
      %v66 = vld [vmem:[#allocation3 + $0x10] sm:$0xff]
      %v67 = vld [vmem:[#allocation3 + $0x18] sm:$0xff]
      %v68 = vld [vmem:[#allocation3 + $0x20] sm:$0xff]
      %v69 = vld [vmem:[#allocation3 + $0x28] sm:$0xff]
      %v70 = vld [vmem:[#allocation3 + $0x30] sm:$0xff]
      %v71 = vld [vmem:[#allocation3 + $0x38] sm:$0xff]
      %v72 = vld [vmem:[#allocation3 + $0x40] sm:$0xff]
      %v73 = vld [vmem:[#allocation3 + $0x48] sm:$0xff]
      %v74 = vld [vmem:[#allocation3 + $0x50] sm:$0xff]
      %v75 = vld [vmem:[#allocation3 + $0x58] sm:$0xff]
      %v76 = vld [vmem:[#allocation3 + $0x60] sm:$0xff]
      %v77 = vld [vmem:[#allocation3 + $0x68] sm:$0xff]
      %v78 = vld [vmem:[#allocation3 + $0x70] sm:$0xff]
      %v79 = vld [vmem:[#allocation3 + $0x78] sm:$0xff]
      %v80 = vld [vmem:[%s3] sm:$0x1]
      %v82 = vlaneseq
      %v83 = vshrl.u32 %v82, 7
      %v84 = vsub.s32 0, %v83
      %v85 = vrot.slane %v80, %v84
      %87 = vmatprep.subr.mxu0 0.0
      %88 = vmatpush1.msra.mxu0 %v79
      %89 = vmatprep.subr.mxu0 0.0
      %90 = vmatpush1.msra.mxu0 %v78
      %91 = vmatprep.subr.mxu0 0.0
      %92 = vmatpush1.msra.mxu0 %v77
      %93 = vmatprep.subr.mxu0 0.0
      %94 = vmatpush1.msra.mxu0 %v76
      %95 = vmatprep.subr.mxu0 0.0
      %96 = vmatpush1.msra.mxu0 %v75
      %97 = vmatprep.subr.mxu0 0.0
      %98 = vmatpush1.msra.mxu0 %v74
      %99 = vmatprep.subr.mxu0 0.0
      %100 = vmatpush1.msra.mxu0 %v73
      %101 = vmatprep.subr.mxu0 0.0
      %102 = vmatpush1.msra.mxu0 %v72
      %103 = vmatprep.subr.mxu0 0.0
      %104 = vmatpush1.msra.mxu0 %v71
      %105 = vmatprep.subr.mxu0 0.0
      %106 = vmatpush1.msra.mxu0 %v70
      %107 = vmatprep.subr.mxu0 0.0
      %108 = vmatpush1.msra.mxu0 %v69
      %109 = vmatprep.subr.mxu0 0.0
      %110 = vmatpush1.msra.mxu0 %v68
      %111 = vmatprep.subr.mxu0 0.0
      %112 = vmatpush1.msra.mxu0 %v67
      %113 = vmatprep.subr.mxu0 0.0
      %114 = vmatpush1.msra.mxu0 %v66
      %115 = vmatprep.subr.mxu0 0.0
      %116 = vmatpush1.msra.mxu0 %v65
      %117 = vmatprep.subr.mxu0 0.0
      %118 = vmatpush1.msra.mxu0 %v64
      %119 = vmatprep.subr.mxu0 0.0
      %120 = vmatpush2.msra.mxu0 0.0
      %121 = vmatprep.subr.mxu0 0.0
      %122 = vmatpush2.msra.mxu0 0.0
      %123 = vmatprep.subr.mxu0 0.0
      %124 = vmatpush2.msra.mxu0 0.0
      %125 = vmatprep.subr.mxu0 0.0
      %126 = vmatpush2.msra.mxu0 0.0
      %127 = vmatprep.subr.mxu0 0.0
      %128 = vmatpush2.msra.mxu0 0.0
      %129 = vmatprep.subr.mxu0 0.0
      %130 = vmatpush2.msra.mxu0 0.0
      %131 = vmatprep.subr.mxu0 0.0
      %132 = vmatpush2.msra.mxu0 0.0
      %133 = vmatprep.subr.mxu0 0.0
      %134 = vmatpush2.msra.mxu0 0.0
      %135 = vmatprep.subr.mxu0 0.0
      %136 = vmatpush2.msra.mxu0 0.0
      %137 = vmatprep.subr.mxu0 0.0
      %138 = vmatpush2.msra.mxu0 0.0
      %139 = vmatprep.subr.mxu0 0.0
      %140 = vmatpush2.msra.mxu0 0.0
      %141 = vmatprep.subr.mxu0 0.0
      %142 = vmatpush2.msra.mxu0 0.0
      %143 = vmatprep.subr.mxu0 0.0
      %144 = vmatpush2.msra.mxu0 0.0
      %145 = vmatprep.subr.mxu0 0.0
      %146 = vmatpush2.msra.mxu0 0.0
      %147 = vmatprep.subr.mxu0 0.0
      %148 = vmatpush2.msra.mxu0 0.0
      %149 = vmatprep.subr.mxu0 0.0
      %150 = vmatpush2.msra.mxu0 0.0
      %151 = vmatprep.mubr.f32.mxu0 0.0
      %152 = vmatmul.mubr.f32.gmra.mxu0 %v62
      %v153 = vpop.f32.mrf.mxu0
      %v154 = vadd.f32 %v85, %v153
      %v155 = vpop.f32.mrf.mxu0
      %156 = vmatprep.mubr.f32.mxu0 0.0
      %157 = vmatmul.mubr.f32.gmra.mxu0 %v63
      %v158 = vpop.f32.mrf.mxu0
      %v159 = vadd.f32 %v85, %v158
      %v160 = vpop.f32.mrf.mxu0
      %161 = vdwg.mxu0
      %v162 = vmul.f32 %v154, 0.5
      %v163 = vmul.f32 %v159, 0.5
      %v164 = vmul.f32 %v154, 0.70710677
      %v165 = vmul.f32 %v159, 0.70710677
      %v166 = verf.f32.pop %v164
      %v167 = verf.f32.pop %v165
      %v168 = vadd.f32 %v166, 1.0
      %v169 = vadd.f32 %v167, 1.0
      %v170 = vmul.f32 %v162, %v168
      %v171 = vmul.f32 %v163, %v169
      %172 = vadd.xlane.f32.xlu0 %v170
      %v173 = vpop.xlane.xlu0 %172
      %174 = vadd.xlane.f32.xlu0 %v171
      %v175 = vpop.xlane.xlu0 %174
      %v176 = vmul.f32 %v173, 0.0078125
      %v177 = vmul.f32 %v175, 0.0078125
      %v178 = vmul.f32 %v170, %v170
      %v179 = vmul.f32 %v171, %v171
      %180 = vadd.xlane.f32.xlu0 %v178
      %v181 = vpop.xlane.xlu0 %180
      %182 = vadd.xlane.f32.xlu0 %v179
      %v183 = vpop.xlane.xlu0 %182
      %v184 = vmul.f32 %v181, 0.0078125
      %v185 = vmul.f32 %v183, 0.0078125
      %v186 = vmul.f32 %v176, %v176
      %v187 = vmul.f32 %v177, %v177
      %v188 = vsub.f32 %v184, %v186
      %v189 = vsub.f32 %v185, %v187
      %v190 = vmax.f32 %v188, 0.0
      %v191 = vmax.f32 %v189, 0.0
      %v192 = vadd.f32 %v190, 1e-12
      %v193 = vadd.f32 %v191, 1e-12
      %v194 = vrsqrt.pop %v192
      %v195 = vrsqrt.pop %v193
      %v196 = vsub.f32 %v170, %v176
      %v197 = vsub.f32 %v171, %v177
      %v198 = vmul.f32 %v196, %v194
      %v199 = vmul.f32 %v197, %v195
      %v200 = vld [vmem:[%s4] sm:$0x1]
      %v202 = vlaneseq
      %v203 = vshrl.u32 %v202, 7
      %v204 = vsub.s32 0, %v203
      %v205 = vrot.slane %v200, %v204
      %v207 = vmul.f32 %v198, %v205
      %v208 = vmul.f32 %v199, %v205
      %v209 = vld [vmem:[%s5] sm:$0x1]
      %v211 = vlaneseq
      %v212 = vshrl.u32 %v211, 7
      %v213 = vsub.s32 0, %v212
      %v214 = vrot.slane %v209, %v213
      %v216 = vadd.f32 %v207, %v214
      %v217 = vadd.f32 %v208, %v214
      %218 = vst [vmem:[#allocation2] sm:$0xff] %v216
      %219 = vst [vmem:[#allocation2 + $0x10] sm:$0xff] %v217
      %v220 = vld [vmem:[%s1] sm:$0xff]
      %v221 = vld [vmem:[%s1 + $0x8] sm:$0xff]
      %vm222 = vcmask 64512
      %223 = vst.msk [vmem:[#allocation2 + $0x8] sm:$0xff] %vm222, %v220
      %224 = vst.msk [vmem:[#allocation2 + $0x18] sm:$0xff] %vm222, %v221
    $region45: #{tpu_custom_call.1} parent=1 // pred_fallthru
      _
    %v225 = vld [vmem:[#allocation2] sm:$0xff]
    %v226 = vld [vmem:[#allocation2 + $0x8] sm:$0xff]
    %v227 = vld [vmem:[#allocation2 + $0x10] sm:$0xff]
    %v228 = vld [vmem:[#allocation2 + $0x18] sm:$0xff]
    %v229 = vld [vmem:[#allocation6] sm:$0xff]
    %v230 = vld [vmem:[#allocation6 + $0x8] sm:$0xff]
    %v231 = vld [vmem:[#allocation6 + $0x10] sm:$0xff]
    %v232 = vld [vmem:[#allocation6 + $0x18] sm:$0xff]
    %v233 = vld [vmem:[#allocation6 + $0x20] sm:$0xff]
    %v234 = vld [vmem:[#allocation6 + $0x28] sm:$0xff]
    %v235 = vld [vmem:[#allocation6 + $0x30] sm:$0xff]
    %v236 = vld [vmem:[#allocation6 + $0x38] sm:$0xff]
    %v237 = vld [vmem:[#allocation6 + $0x40] sm:$0xff]
    %v238 = vld [vmem:[#allocation6 + $0x48] sm:$0xff]
    %v239 = vld [vmem:[#allocation6 + $0x50] sm:$0xff]
    %v240 = vld [vmem:[#allocation6 + $0x58] sm:$0xff]
    %v241 = vld [vmem:[#allocation6 + $0x60] sm:$0xff]
    %v242 = vld [vmem:[#allocation6 + $0x68] sm:$0xff]
    %v243 = vld [vmem:[#allocation6 + $0x70] sm:$0xff]
    %v244 = vld [vmem:[#allocation6 + $0x78] sm:$0xff]
    %v245 = vld [vmem:[#allocation6 + $0x80] sm:$0xff]
    %v246 = vld [vmem:[#allocation6 + $0x88] sm:$0xff]
    %v247 = vld [vmem:[#allocation6 + $0x90] sm:$0xff]
    %v248 = vld [vmem:[#allocation6 + $0x98] sm:$0xff]
    %v249 = vld [vmem:[#allocation6 + $0xa0] sm:$0xff]
    %v250 = vld [vmem:[#allocation6 + $0xa8] sm:$0xff]
    %v251 = vld [vmem:[#allocation6 + $0xb0] sm:$0xff]
    %v252 = vld [vmem:[#allocation6 + $0xb8] sm:$0xff]
    %v253 = vld [vmem:[#allocation6 + $0xc0] sm:$0xff]
    %v254 = vld [vmem:[#allocation6 + $0xc8] sm:$0xff]
    %v255 = vld [vmem:[#allocation6 + $0xd0] sm:$0xff]
    %v256 = vld [vmem:[#allocation6 + $0xd8] sm:$0xff]
    %v257 = vld [vmem:[#allocation6 + $0xe0] sm:$0xff]
    %v258 = vld [vmem:[#allocation6 + $0xe8] sm:$0xff]
    %v259 = vld [vmem:[#allocation6 + $0xf0] sm:$0xff]
    %v260 = vld [vmem:[#allocation6 + $0xf8] sm:$0xff]
    %v261 = vld [vmem:[#allocation6 + $0x100] sm:$0xff]
    %v262 = vld [vmem:[#allocation6 + $0x108] sm:$0xff]
    %v263 = vld [vmem:[#allocation6 + $0x110] sm:$0xff]
    %v264 = vld [vmem:[#allocation6 + $0x118] sm:$0xff]
    %v265 = vld [vmem:[#allocation6 + $0x120] sm:$0xff]
    %v266 = vld [vmem:[#allocation6 + $0x128] sm:$0xff]
    %v267 = vld [vmem:[#allocation6 + $0x130] sm:$0xff]
    %v268 = vld [vmem:[#allocation6 + $0x138] sm:$0xff]
    %v269 = vld [vmem:[#allocation6 + $0x140] sm:$0xff]
    %v270 = vld [vmem:[#allocation6 + $0x148] sm:$0xff]
    %v271 = vld [vmem:[#allocation6 + $0x150] sm:$0xff]
    %v272 = vld [vmem:[#allocation6 + $0x158] sm:$0xff]
    %v273 = vld [vmem:[#allocation6 + $0x160] sm:$0xff]
    %v274 = vld [vmem:[#allocation6 + $0x168] sm:$0xff]
    %v275 = vld [vmem:[#allocation6 + $0x170] sm:$0xff]
    %v276 = vld [vmem:[#allocation6 + $0x178] sm:$0xff]
    %v277 = vld [vmem:[#allocation6 + $0x180] sm:$0xff]
    %v278 = vld [vmem:[#allocation6 + $0x188] sm:$0xff]
    %v279 = vld [vmem:[#allocation6 + $0x190] sm:$0xff]
    %v280 = vld [vmem:[#allocation6 + $0x198] sm:$0xff]
    %v281 = vld [vmem:[#allocation6 + $0x1a0] sm:$0xff]
    %v282 = vld [vmem:[#allocation6 + $0x1a8] sm:$0xff]
    %v283 = vld [vmem:[#allocation6 + $0x1b0] sm:$0xff]
    %v284 = vld [vmem:[#allocation6 + $0x1b8] sm:$0xff]
    %v285 = vld [vmem:[#allocation6 + $0x1c0] sm:$0xff]
    %v286 = vld [vmem:[#allocation6 + $0x1c8] sm:$0xff]
    %v287 = vld [vmem:[#allocation6 + $0x1d0] sm:$0xff]
    %v288 = vld [vmem:[#allocation6 + $0x1d8] sm:$0xff]
    %v289 = vld [vmem:[#allocation6 + $0x1e0] sm:$0xff]
    %v290 = vld [vmem:[#allocation6 + $0x1e8] sm:$0xff]
    %v291 = vld [vmem:[#allocation6 + $0x1f0] sm:$0xff]
    %v292 = vld [vmem:[#allocation6 + $0x1f8] sm:$0xff]
    %v293 = vld [vmem:[#allocation6 + $0x200] sm:$0xff]
    %v294 = vld [vmem:[#allocation6 + $0x208] sm:$0xff]
    %v295 = vld [vmem:[#allocation6 + $0x210] sm:$0xff]
    %v296 = vld [vmem:[#allocation6 + $0x218] sm:$0xff]
    %v297 = vld [vmem:[%s7] sm:$0xf]
    %v299 = vlaneseq
    %v300 = vshrl.u32 %v299, 7
    %v301 = vsub.s32 0, %v300
    %v302 = vrot.slane %v297, %v301
    %v303 = vlaneseq
    %v304 = vshrl.u32 %v303, 7
    %v305 = vsub.s32 1, %v304
    %v306 = vrot.slane %v297, %v305
    %v307 = vlaneseq
    %v308 = vshrl.u32 %v307, 7
    %v309 = vsub.s32 2, %v308
    %v310 = vrot.slane %v297, %v309
    %v311 = vlaneseq
    %v312 = vshrl.u32 %v311, 7
    %v313 = vsub.s32 3, %v312
    %v314 = vrot.slane %v297, %v313
    %vm319 = vcmask 64512
    %v321 = vsel %vm319, %v226, 0
    %v324 = vsel %vm319, %v228, 0
    %326 = vmatprep.subr.mxu0 %v290
    %327 = vmatpush1.msra.mxu0 %v289
    %328 = vmatprep.subr.mxu0 %v286
    %329 = vmatpush1.msra.mxu0 %v285
    %330 = vmatprep.subr.mxu0 %v282
    %331 = vmatpush1.msra.mxu0 %v281
    %332 = vmatprep.subr.mxu0 %v278
    %333 = vmatpush1.msra.mxu0 %v277
    %334 = vmatprep.subr.mxu0 %v274
    %335 = vmatpush1.msra.mxu0 %v273
    %336 = vmatprep.subr.mxu0 %v270
    %337 = vmatpush1.msra.mxu0 %v269
    %338 = vmatprep.subr.mxu0 %v266
    %339 = vmatpush1.msra.mxu0 %v265
    %340 = vmatprep.subr.mxu0 %v262
    %341 = vmatpush1.msra.mxu0 %v261
    %342 = vmatprep.subr.mxu0 %v258
    %343 = vmatpush1.msra.mxu0 %v257
    %344 = vmatprep.subr.mxu0 %v254
    %345 = vmatpush1.msra.mxu0 %v253
    %346 = vmatprep.subr.mxu0 %v250
    %347 = vmatpush1.msra.mxu0 %v249
    %348 = vmatprep.subr.mxu0 %v246
    %349 = vmatpush1.msra.mxu0 %v245
    %350 = vmatprep.subr.mxu0 %v242
    %351 = vmatpush1.msra.mxu0 %v241
    %352 = vmatprep.subr.mxu0 %v238
    %353 = vmatpush1.msra.mxu0 %v237
    %354 = vmatprep.subr.mxu0 %v234
    %355 = vmatpush1.msra.mxu0 %v233
    %356 = vmatprep.subr.mxu0 %v230
    %357 = vmatpush1.msra.mxu0 %v229
    %358 = vmatprep.subr.mxu0 0.0
    %359 = vmatpush2.msra.mxu0 0.0
    %360 = vmatprep.subr.mxu0 0.0
    %361 = vmatpush2.msra.mxu0 0.0
    %362 = vmatprep.subr.mxu0 0.0
    %363 = vmatpush2.msra.mxu0 0.0
    %364 = vmatprep.subr.mxu0 0.0
    %365 = vmatpush2.msra.mxu0 0.0
    %366 = vmatprep.subr.mxu0 0.0
    %367 = vmatpush2.msra.mxu0 0.0
    %368 = vmatprep.subr.mxu0 0.0
    %369 = vmatpush2.msra.mxu0 0.0
    %370 = vmatprep.subr.mxu0 0.0
    %371 = vmatpush2.msra.mxu0 0.0
    %372 = vmatprep.subr.mxu0 0.0
    %373 = vmatpush2.msra.mxu0 0.0
    %374 = vmatprep.subr.mxu0 0.0
    %375 = vmatpush2.msra.mxu0 0.0
    %376 = vmatprep.subr.mxu0 0.0
    %377 = vmatpush2.msra.mxu0 0.0
    %378 = vmatprep.subr.mxu0 0.0
    %379 = vmatpush2.msra.mxu0 0.0
    %380 = vmatprep.subr.mxu0 0.0
    %381 = vmatpush2.msra.mxu0 0.0
    %382 = vmatprep.subr.mxu0 0.0
    %383 = vmatpush2.msra.mxu0 0.0
    %384 = vmatprep.subr.mxu0 0.0
    %385 = vmatpush2.msra.mxu0 0.0
    %386 = vmatprep.subr.mxu0 0.0
    %387 = vmatpush2.msra.mxu0 0.0
    %388 = vmatprep.subr.mxu0 %v294
    %389 = vmatpush2.msra.mxu0 %v293
    %390 = vmatprep.mubr.f32.mxu0 %v321
    %391 = vmatmul.mubr.f32.gmra.mxu0 %v225
    %v392 = vpop.f32.mrf.mxu0
    %v393 = vadd.f32 %v302, %v392
    %v394 = vpop.f32.mrf.mxu0
    %v395 = vadd.f32 %v306, %v394
    %396 = vmatprep.mubr.f32.mxu0 %v324
    %397 = vmatmul.mubr.f32.gmra.mxu0 %v227
    %v398 = vpop.f32.mrf.mxu0
    %v399 = vadd.f32 %v302, %v398
    %v400 = vpop.f32.mrf.mxu0
    %v401 = vadd.f32 %v306, %v400
    %402 = vdwg.mxu0
    %403 = vmatprep.subr.mxu0 %v292
    %404 = vmatpush1.msra.mxu0 %v291
    %405 = vmatprep.subr.mxu0 %v288
    %406 = vmatpush1.msra.mxu0 %v287
    %407 = vmatprep.subr.mxu0 %v284
    %408 = vmatpush1.msra.mxu0 %v283
    %409 = vmatprep.subr.mxu0 %v280
    %410 = vmatpush1.msra.mxu0 %v279
    %411 = vmatprep.subr.mxu0 %v276
    %412 = vmatpush1.msra.mxu0 %v275
    %413 = vmatprep.subr.mxu0 %v272
    %414 = vmatpush1.msra.mxu0 %v271
    %415 = vmatprep.subr.mxu0 %v268
    %416 = vmatpush1.msra.mxu0 %v267
    %417 = vmatprep.subr.mxu0 %v264
    %418 = vmatpush1.msra.mxu0 %v263
    %419 = vmatprep.subr.mxu0 %v260
    %420 = vmatpush1.msra.mxu0 %v259
    %421 = vmatprep.subr.mxu0 %v256
    %422 = vmatpush1.msra.mxu0 %v255
    %423 = vmatprep.subr.mxu0 %v252
    %424 = vmatpush1.msra.mxu0 %v251
    %425 = vmatprep.subr.mxu0 %v248
    %426 = vmatpush1.msra.mxu0 %v247
    %427 = vmatprep.subr.mxu0 %v244
    %428 = vmatpush1.msra.mxu0 %v243
    %429 = vmatprep.subr.mxu0 %v240
    %430 = vmatpush1.msra.mxu0 %v239
    %431 = vmatprep.subr.mxu0 %v236
    %432 = vmatpush1.msra.mxu0 %v235
    %433 = vmatprep.subr.mxu0 %v232
    %434 = vmatpush1.msra.mxu0 %v231
    %435 = vmatprep.subr.mxu0 0.0
    %436 = vmatpush2.msra.mxu0 0.0
    %437 = vmatprep.subr.mxu0 0.0
    %438 = vmatpush2.msra.mxu0 0.0
    %439 = vmatprep.subr.mxu0 0.0
    %440 = vmatpush2.msra.mxu0 0.0
    %441 = vmatprep.subr.mxu0 0.0
    %442 = vmatpush2.msra.mxu0 0.0
    %443 = vmatprep.subr.mxu0 0.0
    %444 = vmatpush2.msra.mxu0 0.0
    %445 = vmatprep.subr.mxu0 0.0
    %446 = vmatpush2.msra.mxu0 0.0
    %447 = vmatprep.subr.mxu0 0.0
    %448 = vmatpush2.msra.mxu0 0.0
    %449 = vmatprep.subr.mxu0 0.0
    %450 = vmatpush2.msra.mxu0 0.0
    %451 = vmatprep.subr.mxu0 0.0
    %452 = vmatpush2.msra.mxu0 0.0
    %453 = vmatprep.subr.mxu0 0.0
    %454 = vmatpush2.msra.mxu0 0.0
    %455 = vmatprep.subr.mxu0 0.0
    %456 = vmatpush2.msra.mxu0 0.0
    %457 = vmatprep.subr.mxu0 0.0
    %458 = vmatpush2.msra.mxu0 0.0
    %459 = vmatprep.subr.mxu0 0.0
    %460 = vmatpush2.msra.mxu0 0.0
    %461 = vmatprep.subr.mxu0 0.0
    %462 = vmatpush2.msra.mxu0 0.0
    %463 = vmatprep.subr.mxu0 0.0
    %464 = vmatpush2.msra.mxu0 0.0
    %465 = vmatprep.subr.mxu0 %v296
    %466 = vmatpush2.msra.mxu0 %v295
    %467 = vmatprep.mubr.f32.mxu0 %v321
    %468 = vmatmul.mubr.f32.gmra.mxu0 %v225
    %v469 = vpop.f32.mrf.mxu0
    %v470 = vadd.f32 %v310, %v469
    %v471 = vpop.f32.mrf.mxu0
    %v472 = vadd.f32 %v314, %v471
    %473 = vmatprep.mubr.f32.mxu0 %v324
    %474 = vmatmul.mubr.f32.gmra.mxu0 %v227
    %v475 = vpop.f32.mrf.mxu0
    %v476 = vadd.f32 %v310, %v475
    %v477 = vpop.f32.mrf.mxu0
    %v478 = vadd.f32 %v314, %v477
    %479 = vdwg.mxu0
    %480 = vst [vmem:[#allocation8] sm:$0xff] %v393
    %481 = vst [vmem:[#allocation8 + $0x8] sm:$0xff] %v395
    %482 = vst [vmem:[#allocation8 + $0x10] sm:$0xff] %v470
    %483 = vst [vmem:[#allocation8 + $0x18] sm:$0xff] %v472
    %484 = vst [vmem:[#allocation8 + $0x20] sm:$0xff] %v399
    %485 = vst [vmem:[#allocation8 + $0x28] sm:$0xff] %v401
    %486 = vst [vmem:[#allocation8 + $0x30] sm:$0xff] %v476
    %487 = vst [vmem:[#allocation8 + $0x38] sm:$0xff] %v478
    // Predicated region
    $region46: #{tpu_custom_call.1} parent=1 // pred_check
      _
    $region47: #{tpu_custom_call.1} parent=1 // pred_check_branch
      %489 = sbr.rel (0) target = $region49
    $region48: #{tpu_custom_call.1} parent=1 // pred_region
      %s491 = ssub.s32 1024, 1024
      %492 = vsyncadd [#allocation5], %s491
      %s493 = sshll.u32 [#allocation8], 4
      %s494 = int_to_ptr.vmem [resolvable:$true] %s493
      %499 = dma.vmem_to_hbm [thread:$0]  %s494, 1024, %s8, [#allocation5], 512, 512, 32
    $region49: #{tpu_custom_call.1} parent=1 // pred_fallthru
      _
    // Predicated region
    $region50: #{tpu_custom_call.1} parent=1 // pred_check
      _
    $region51: #{tpu_custom_call.1} parent=1 // pred_check_branch
      %501 = sbr.rel (0) target = $region53
    $region52: #{tpu_custom_call.1} parent=1 // pred_region
      %502 = dma.done [#allocation5], 1024
    $region53: #{tpu_custom_call.1} parent=1 // pred_fallthru
      _
    %503 = vsyncpa [#allocation4], 1
    %504 = vsyncpa [#allocation7], 1
    %505 = vsyncpa [#allocation5], 1

</llo_original>
